<compile_context>
chip_gen: v7x
topology: tpu7x:2x2x1
jax: 0.10.0
libtpu: 0.0.40
codegen_flags: <defaults>
</compile_context>

<pallas_src>
import functools

import jax
import jax.numpy as jnp
from jax.experimental import pallas as pl
from jax.experimental.pallas import tpu as pltpu


def _lstm_kernel(x_ref, wx_ref, wh_ref, hseq_ref, h_ref, c_ref, *,
                 hidden_size, block_t):
    """One grid step == one (batch_tile, time_chunk). h_ref / c_ref are
    resident output blocks (index constant along the time axis) that double
    as the recurrent state."""
    HZ = hidden_size
    t_chunk = pl.program_id(1)

    @pl.when(t_chunk == 0)
    def _init():
        h_ref[...] = jnp.zeros_like(h_ref)
        c_ref[...] = jnp.zeros_like(c_ref)

    # Resident bf16 weights (constant index map -> fetched once, no re-DMA).
    wx = wx_ref[...]          # (D, 4H)  bf16
    wh = wh_ref[...]          # (H, 4H)  bf16

    h_t = h_ref[...]          # (TB, H)  f32
    c_t = c_ref[...]          # (TB, H)  f32

    # Fully-unrolled static loop over the timesteps of this chunk; the LLO
    # scheduler can overlap MXU / EUP / VPU work across timesteps.
    for t in range(block_t):
        x_t = x_ref[:, t, :].astype(jnp.bfloat16)          # (TB, D) bf16
        preact = (
            jnp.dot(x_t, wx, preferred_element_type=jnp.float32)
            + jnp.dot(h_t.astype(jnp.bfloat16), wh,
                      preferred_element_type=jnp.float32)
        )                                                   # (TB, 4H) f32

        # Double sigmoid on the whole (TB, 3H) slab (matches the reference),
        # then slice i/f/o out of the already-activated slab.
        ifo = jax.nn.sigmoid(jax.nn.sigmoid(preact[:, : 3 * HZ]))
        i_t = ifo[:, :HZ]
        f_t = ifo[:, HZ:2 * HZ]
        o_t = ifo[:, 2 * HZ:3 * HZ]
        g_t = jnp.tanh(preact[:, 3 * HZ:])

        c_t = f_t * c_t + i_t * g_t
        h_t = o_t * jnp.tanh(c_t)

        hseq_ref[:, t, :] = h_t      # accumulate into the (TB, TT, H) block

    h_ref[...] = h_t
    c_ref[...] = c_t


def _pick_block_t(T):
    """Largest time-chunk in {32,16,8} that divides T (keeps the sublane dim a
    multiple of 8); fall back to the full sequence for small / odd T."""
    for cand in (32, 16, 8):
        if T % cand == 0:
            return cand
    return T


def lstm_cell_forward(x, wx, wh, *, block_t=None, block_b=None):
    """x: (B, T, input_size) f32; wx: (D, 4H); wh: (H, 4H) (transposed vs
    nn.Linear, bias=False). Returns (hidden_seq (B,T,H), (h_T, c_T))."""
    B, T, D = x.shape
    H4 = wx.shape[1]
    HZ = H4 // 4
    assert wx.shape == (D, H4) and wh.shape == (HZ, H4)

    if block_t is None:
        block_t = _pick_block_t(T)
    assert T % block_t == 0 and (block_t % 8 == 0 or block_t == T)

    if block_b is None or B % block_b != 0:
        block_b = B
    assert block_b == B or block_b % 8 == 0

    # bf16 matmul operands (MXU-native on v5e/v6e/v7x); accumulation and all
    # gate/state arithmetic remain f32 inside the kernel.
    wx_b = wx.astype(jnp.bfloat16)
    wh_b = wh.astype(jnp.bfloat16)

    kernel = functools.partial(_lstm_kernel, hidden_size=HZ, block_t=block_t)
    grid = (B // block_b, T // block_t)

    # Explicit VMEM budget: double-buffered activation blocks + resident
    # weights + slack (clamped to the v7x 64 MiB per-core physical limit).
    blk_bytes = (block_b * block_t * D * 4          # x block (f32 in HBM/VMEM)
                 + block_b * block_t * HZ * 4       # hseq block (f32)
                 + 2 * block_b * HZ * 4)            # h, c blocks
    w_bytes = (D * H4 + HZ * H4) * 2                # bf16 weights
    vmem_limit = int(min(64 << 20,
                         max(32 << 20, 4 * blk_bytes + 2 * w_bytes + (2 << 20))))

    hseq, h_fin, c_fin = pl.pallas_call(
        kernel,
        out_shape=(
            jax.ShapeDtypeStruct((B, T, HZ), jnp.float32),
            jax.ShapeDtypeStruct((B, HZ), jnp.float32),
            jax.ShapeDtypeStruct((B, HZ), jnp.float32),
        ),
        grid_spec=pltpu.PrefetchScalarGridSpec(
            num_scalar_prefetch=0,
            grid=grid,
            in_specs=[
                pl.BlockSpec((block_b, block_t, D), lambda b, i: (b, i, 0)),  # x
                pl.BlockSpec((D, H4), lambda b, i: (0, 0)),    # Wx (resident)
                pl.BlockSpec((HZ, H4), lambda b, i: (0, 0)),   # Wh (resident)
            ],
            out_specs=(
                pl.BlockSpec((block_b, block_t, HZ), lambda b, i: (b, i, 0)),  # hidden_seq
                pl.BlockSpec((block_b, HZ), lambda b, i: (b, 0)),  # h state/out
                pl.BlockSpec((block_b, HZ), lambda b, i: (b, 0)),  # c state/out
            ),
        ),
        compiler_params=pltpu.CompilerParams(
            # batch tiles are independent (megacore-shardable); time is the
            # recurrence and must stay sequential.
            dimension_semantics=("parallel", "arbitrary"),
            vmem_limit_bytes=vmem_limit,
        ),
    )(x, wx_b, wh_b)

    return hseq, (h_fin, c_fin)


def _reference_forward(x, wx, wh, matmul_dtype=jnp.float32):
    """Pure-JAX replica of the PyTorch forward. With matmul_dtype=bf16 it also
    mirrors the kernel's mixed-precision matmuls (f32 accumulation)."""
    B, T, D = x.shape
    HZ = wh.shape[0]
    wx_m = wx.astype(matmul_dtype)
    wh_m = wh.astype(matmul_dtype)
    h = jnp.zeros((B, HZ), jnp.float32)
    c = jnp.zeros((B, HZ), jnp.float32)
    outs = []
    for t in range(T):
        preact = (
            jnp.dot(x[:, t, :].astype(matmul_dtype), wx_m,
                    preferred_element_type=jnp.float32)
            + jnp.dot(h.astype(matmul_dtype), wh_m,
                      preferred_element_type=jnp.float32)
        )
        gates = jax.nn.sigmoid(preact[:, : 3 * HZ])
        i_t = jax.nn.sigmoid(gates[:, :HZ])
        f_t = jax.nn.sigmoid(gates[:, HZ:2 * HZ])
        o_t = jax.nn.sigmoid(gates[:, 2 * HZ:3 * HZ])
        g_t = jnp.tanh(preact[:, 3 * HZ:])
        c = f_t * c + i_t * g_t
        h = o_t * jnp.tanh(c)
        outs.append(h)
    return jnp.stack(outs, axis=1), (h, c)


if __name__ == "__main__":
    # Small shapes consistent with the module's forward: x (batch, seq, input_size)
    B, T, D, HZ = 2, 8, 16, 32

    key = jax.random.PRNGKey(0)
    kx, kwx, kwh = jax.random.split(key, 3)

    x = jax.random.normal(kx, (B, T, D), dtype=jnp.float32)

    # nn.Linear default init: U(-1/sqrt(fan_in), 1/sqrt(fan_in)); bias=False.
    wx = jax.random.uniform(kwx, (D, 4 * HZ), jnp.float32,
                            minval=-1.0 / jnp.sqrt(D), maxval=1.0 / jnp.sqrt(D))
    wh = jax.random.uniform(kwh, (HZ, 4 * HZ), jnp.float32,
                            minval=-1.0 / jnp.sqrt(HZ), maxval=1.0 / jnp.sqrt(HZ))

    hidden_seq, (h_fin, c_fin) = jax.block_until_ready(
        jax.jit(lstm_cell_forward)(x, wx, wh)
    )
    assert hidden_seq.shape == (B, T, HZ)
    assert h_fin.shape == (B, HZ) and c_fin.shape == (B, HZ)

    # Tight check against a reference with the same bf16-operand / f32-accum
    # matmul semantics (validates the kernel mechanics).
    ref_seq_b, (ref_h_b, ref_c_b) = _reference_forward(
        x, wx, wh, matmul_dtype=jnp.bfloat16)
    assert jnp.allclose(hidden_seq, ref_seq_b, atol=2e-3, rtol=2e-3)
    assert jnp.allclose(h_fin, ref_h_b, atol=2e-3, rtol=2e-3)
    assert jnp.allclose(c_fin, ref_c_b, atol=2e-3, rtol=2e-3)

    # Loose sanity check against the exact f32 PyTorch semantics; the bf16
    # matmul operands are an accepted numerics tradeoff from the perf review.
    ref_seq, (ref_h, ref_c) = _reference_forward(x, wx, wh)
    assert jnp.allclose(hidden_seq, ref_seq, atol=5e-2, rtol=5e-2)
    assert jnp.allclose(h_fin, ref_h, atol=5e-2, rtol=5e-2)
    assert jnp.allclose(c_fin, ref_c, atol=5e-2, rtol=5e-2)

    print("KERNEL_OK")
</pallas_src>

<mosaic_0001>
module attributes {stable_mosaic.version = 11 : i64} {
  func.func @_lstm_kernel(%arg0: i32, %arg1: i32, %arg2: memref<2x8x16xf32, #tpu.memory_space<vmem>>, %arg3: memref<16x128xbf16, #tpu.memory_space<vmem>>, %arg4: memref<32x128xbf16, #tpu.memory_space<vmem>>, %arg5: memref<2x8x32xf32, #tpu.memory_space<vmem>>, %arg6: memref<2x32xf32, #tpu.memory_space<vmem>>, %arg7: memref<2x32xf32, #tpu.memory_space<vmem>>) attributes {dimension_semantics = [#tpu.dimension_semantics<parallel>, #tpu.dimension_semantics<arbitrary>], iteration_bounds = array<i64: 1, 1>, scalar_prefetch = 0 : i64, scratch_operands = 0 : i64, tpu.core_type = #tpu.core_type<tc>, window_params = [{transform_indices = @transform_0, window_bounds = array<i64: 2, 8, 16>}, {pipeline_mode = #tpu.pipeline_mode<synchronous>, transform_indices = @transform_1, window_bounds = array<i64: 16, 128>}, {pipeline_mode = #tpu.pipeline_mode<synchronous>, transform_indices = @transform_2, window_bounds = array<i64: 32, 128>}, {transform_indices = @transform_3, window_bounds = array<i64: 2, 8, 32>}, {transform_indices = @transform_4, window_bounds = array<i64: 2, 32>}, {transform_indices = @transform_5, window_bounds = array<i64: 2, 32>}]} {
    %c0_i32 = arith.constant 0 : i32
    %0 = arith.cmpi eq, %arg1, %c0_i32 : i32
    %1 = arith.extui %0 : i1 to i32
    %c0_i32_0 = arith.constant 0 : i32
    %2 = arith.cmpi ne, %1, %c0_i32_0 : i32
    scf.if %2 {
      %cst_84 = arith.constant 0.000000e+00 : f32
      %257 = vector.broadcast %cst_84 : f32 to vector<2x32xf32>
      %c0_85 = arith.constant 0 : index
      %c0_86 = arith.constant 0 : index
      %258 = vector.load %arg6[%c0_85, %c0_86] : memref<2x32xf32, #tpu.memory_space<vmem>>, vector<2x32xf32>
      tpu.vector_store %arg6[%c0_85, %c0_86], %257 {strides = array<i32>} : memref<2x32xf32, #tpu.memory_space<vmem>>, vector<2x32xf32>,
      %cst_87 = arith.constant 0.000000e+00 : f32
      %259 = vector.broadcast %cst_87 : f32 to vector<2x32xf32>
      %c0_88 = arith.constant 0 : index
      %c0_89 = arith.constant 0 : index
      %260 = vector.load %arg7[%c0_88, %c0_89] : memref<2x32xf32, #tpu.memory_space<vmem>>, vector<2x32xf32>
      tpu.vector_store %arg7[%c0_88, %c0_89], %259 {strides = array<i32>} : memref<2x32xf32, #tpu.memory_space<vmem>>, vector<2x32xf32>,
    } else {
    }
    %c0 = arith.constant 0 : index
    %c0_1 = arith.constant 0 : index
    %3 = vector.load %arg3[%c0, %c0_1] : memref<16x128xbf16, #tpu.memory_space<vmem>>, vector<16x128xbf16>
    %c0_2 = arith.constant 0 : index
    %c0_3 = arith.constant 0 : index
    %4 = vector.load %arg4[%c0_2, %c0_3] : memref<32x128xbf16, #tpu.memory_space<vmem>>, vector<32x128xbf16>
    %c0_4 = arith.constant 0 : index
    %c0_5 = arith.constant 0 : index
    %5 = vector.load %arg6[%c0_4, %c0_5] : memref<2x32xf32, #tpu.memory_space<vmem>>, vector<2x32xf32>
    %c0_6 = arith.constant 0 : index
    %c0_7 = arith.constant 0 : index
    %6 = vector.load %arg7[%c0_6, %c0_7] : memref<2x32xf32, #tpu.memory_space<vmem>>, vector<2x32xf32>
    %c0_8 = arith.constant 0 : index
    %c0_9 = arith.constant 0 : index
    %c0_10 = arith.constant 0 : index
    %7 = vector.load %arg2[%c0_8, %c0_9, %c0_10] : memref<2x8x16xf32, #tpu.memory_space<vmem>>, vector<2x1x16xf32>
    %8 = vector.shape_cast %7 : vector<2x1x16xf32> to vector<2x16xf32>
    %9 = arith.truncf %8 : vector<2x16xf32> to vector<2x16xbf16>
    %cst = arith.constant dense<0.000000e+00> : vector<2x128xf32>
    %10 = tpu.matmul %9, %3, %cst {dimension_numbers = #tpu.dot_dimension_numbers<[1], [0], [0], [1], [0, 0, 1, 1], [], []>} : vector<2x16xbf16>, vector<16x128xbf16>, vector<2x128xf32> -> vector<2x128xf32>
    %11 = arith.truncf %5 : vector<2x32xf32> to vector<2x32xbf16>
    %cst_11 = arith.constant dense<0.000000e+00> : vector<2x128xf32>
    %12 = tpu.matmul %11, %4, %cst_11 {dimension_numbers = #tpu.dot_dimension_numbers<[1], [0], [0], [1], [0, 0, 1, 1], [], []>} : vector<2x32xbf16>, vector<32x128xbf16>, vector<2x128xf32> -> vector<2x128xf32>
    %13 = arith.addf %10, %12 : vector<2x128xf32>
    %14 = vector.extract_strided_slice %13 {offsets = [0, 0], sizes = [2, 96], strides = [1, 1]} : vector<2x128xf32> to vector<2x96xf32>
    %15 = arith.negf %14 : vector<2x96xf32>
    %16 = math.exp %15 : vector<2x96xf32>
    %cst_12 = arith.constant 1.000000e+00 : f32
    %17 = vector.broadcast %cst_12 : f32 to vector<2x96xf32>
    %18 = arith.addf %17, %16 : vector<2x96xf32>
    %19 = arith.divf %17, %18 : vector<2x96xf32>
    %20 = arith.negf %19 : vector<2x96xf32>
    %21 = math.exp %20 : vector<2x96xf32>
    %cst_13 = arith.constant 1.000000e+00 : f32
    %22 = vector.broadcast %cst_13 : f32 to vector<2x96xf32>
    %23 = arith.addf %22, %21 : vector<2x96xf32>
    %24 = arith.divf %22, %23 : vector<2x96xf32>
    %25 = vector.extract_strided_slice %24 {offsets = [0, 0], sizes = [2, 32], strides = [1, 1]} : vector<2x96xf32> to vector<2x32xf32>
    %26 = vector.extract_strided_slice %24 {offsets = [0, 32], sizes = [2, 32], strides = [1, 1]} : vector<2x96xf32> to vector<2x32xf32>
    %27 = vector.extract_strided_slice %24 {offsets = [0, 64], sizes = [2, 32], strides = [1, 1]} : vector<2x96xf32> to vector<2x32xf32>
    %28 = vector.extract_strided_slice %13 {offsets = [0, 96], sizes = [2, 32], strides = [1, 1]} : vector<2x128xf32> to vector<2x32xf32>
    %29 = math.tanh %28 : vector<2x32xf32>
    %30 = arith.mulf %26, %6 : vector<2x32xf32>
    %31 = arith.mulf %25, %29 : vector<2x32xf32>
    %32 = arith.addf %30, %31 : vector<2x32xf32>
    %33 = math.tanh %32 : vector<2x32xf32>
    %34 = arith.mulf %27, %33 : vector<2x32xf32>
    %c0_14 = arith.constant 0 : index
    %c0_15 = arith.constant 0 : index
    %c0_16 = arith.constant 0 : index
    %35 = vector.load %arg5[%c0_14, %c0_15, %c0_16] : memref<2x8x32xf32, #tpu.memory_space<vmem>>, vector<2x1x32xf32>
    %36 = vector.shape_cast %35 : vector<2x1x32xf32> to vector<2x32xf32>
    %37 = vector.shape_cast %34 : vector<2x32xf32> to vector<2x1x32xf32>
    tpu.vector_store %arg5[%c0_14, %c0_15, %c0_16], %37 {strides = array<i32>} : memref<2x8x32xf32, #tpu.memory_space<vmem>>, vector<2x1x32xf32>,
    %c0_17 = arith.constant 0 : index
    %c1 = arith.constant 1 : index
    %c0_18 = arith.constant 0 : index
    %38 = vector.load %arg2[%c0_17, %c1, %c0_18] : memref<2x8x16xf32, #tpu.memory_space<vmem>>, vector<2x1x16xf32>
    %39 = vector.shape_cast %38 : vector<2x1x16xf32> to vector<2x16xf32>
    %40 = arith.truncf %39 : vector<2x16xf32> to vector<2x16xbf16>
    %cst_19 = arith.constant dense<0.000000e+00> : vector<2x128xf32>
    %41 = tpu.matmul %40, %3, %cst_19 {dimension_numbers = #tpu.dot_dimension_numbers<[1], [0], [0], [1], [0, 0, 1, 1], [], []>} : vector<2x16xbf16>, vector<16x128xbf16>, vector<2x128xf32> -> vector<2x128xf32>
    %42 = arith.truncf %34 : vector<2x32xf32> to vector<2x32xbf16>
    %cst_20 = arith.constant dense<0.000000e+00> : vector<2x128xf32>
    %43 = tpu.matmul %42, %4, %cst_20 {dimension_numbers = #tpu.dot_dimension_numbers<[1], [0], [0], [1], [0, 0, 1, 1], [], []>} : vector<2x32xbf16>, vector<32x128xbf16>, vector<2x128xf32> -> vector<2x128xf32>
    %44 = arith.addf %41, %43 : vector<2x128xf32>
    %45 = vector.extract_strided_slice %44 {offsets = [0, 0], sizes = [2, 96], strides = [1, 1]} : vector<2x128xf32> to vector<2x96xf32>
    %46 = arith.negf %45 : vector<2x96xf32>
    %47 = math.exp %46 : vector<2x96xf32>
    %cst_21 = arith.constant 1.000000e+00 : f32
    %48 = vector.broadcast %cst_21 : f32 to vector<2x96xf32>
    %49 = arith.addf %48, %47 : vector<2x96xf32>
    %50 = arith.divf %48, %49 : vector<2x96xf32>
    %51 = arith.negf %50 : vector<2x96xf32>
    %52 = math.exp %51 : vector<2x96xf32>
    %cst_22 = arith.constant 1.000000e+00 : f32
    %53 = vector.broadcast %cst_22 : f32 to vector<2x96xf32>
    %54 = arith.addf %53, %52 : vector<2x96xf32>
    %55 = arith.divf %53, %54 : vector<2x96xf32>
    %56 = vector.extract_strided_slice %55 {offsets = [0, 0], sizes = [2, 32], strides = [1, 1]} : vector<2x96xf32> to vector<2x32xf32>
    %57 = vector.extract_strided_slice %55 {offsets = [0, 32], sizes = [2, 32], strides = [1, 1]} : vector<2x96xf32> to vector<2x32xf32>
    %58 = vector.extract_strided_slice %55 {offsets = [0, 64], sizes = [2, 32], strides = [1, 1]} : vector<2x96xf32> to vector<2x32xf32>
    %59 = vector.extract_strided_slice %44 {offsets = [0, 96], sizes = [2, 32], strides = [1, 1]} : vector<2x128xf32> to vector<2x32xf32>
    %60 = math.tanh %59 : vector<2x32xf32>
    %61 = arith.mulf %57, %32 : vector<2x32xf32>
    %62 = arith.mulf %56, %60 : vector<2x32xf32>
    %63 = arith.addf %61, %62 : vector<2x32xf32>
    %64 = math.tanh %63 : vector<2x32xf32>
    %65 = arith.mulf %58, %64 : vector<2x32xf32>
    %c0_23 = arith.constant 0 : index
    %c1_24 = arith.constant 1 : index
    %c0_25 = arith.constant 0 : index
    %66 = vector.load %arg5[%c0_23, %c1_24, %c0_25] : memref<2x8x32xf32, #tpu.memory_space<vmem>>, vector<2x1x32xf32>
    %67 = vector.shape_cast %66 : vector<2x1x32xf32> to vector<2x32xf32>
    %68 = vector.shape_cast %65 : vector<2x32xf32> to vector<2x1x32xf32>
    tpu.vector_store %arg5[%c0_23, %c1_24, %c0_25], %68 {strides = array<i32>} : memref<2x8x32xf32, #tpu.memory_space<vmem>>, vector<2x1x32xf32>,
    %c0_26 = arith.constant 0 : index
    %c2 = arith.constant 2 : index
    %c0_27 = arith.constant 0 : index
    %69 = vector.load %arg2[%c0_26, %c2, %c0_27] : memref<2x8x16xf32, #tpu.memory_space<vmem>>, vector<2x1x16xf32>
    %70 = vector.shape_cast %69 : vector<2x1x16xf32> to vector<2x16xf32>
    %71 = arith.truncf %70 : vector<2x16xf32> to vector<2x16xbf16>
    %cst_28 = arith.constant dense<0.000000e+00> : vector<2x128xf32>
    %72 = tpu.matmul %71, %3, %cst_28 {dimension_numbers = #tpu.dot_dimension_numbers<[1], [0], [0], [1], [0, 0, 1, 1], [], []>} : vector<2x16xbf16>, vector<16x128xbf16>, vector<2x128xf32> -> vector<2x128xf32>
    %73 = arith.truncf %65 : vector<2x32xf32> to vector<2x32xbf16>
    %cst_29 = arith.constant dense<0.000000e+00> : vector<2x128xf32>
    %74 = tpu.matmul %73, %4, %cst_29 {dimension_numbers = #tpu.dot_dimension_numbers<[1], [0], [0], [1], [0, 0, 1, 1], [], []>} : vector<2x32xbf16>, vector<32x128xbf16>, vector<2x128xf32> -> vector<2x128xf32>
    %75 = arith.addf %72, %74 : vector<2x128xf32>
    %76 = vector.extract_strided_slice %75 {offsets = [0, 0], sizes = [2, 96], strides = [1, 1]} : vector<2x128xf32> to vector<2x96xf32>
    %77 = arith.negf %76 : vector<2x96xf32>
    %78 = math.exp %77 : vector<2x96xf32>
    %cst_30 = arith.constant 1.000000e+00 : f32
    %79 = vector.broadcast %cst_30 : f32 to vector<2x96xf32>
    %80 = arith.addf %79, %78 : vector<2x96xf32>
    %81 = arith.divf %79, %80 : vector<2x96xf32>
    %82 = arith.negf %81 : vector<2x96xf32>
    %83 = math.exp %82 : vector<2x96xf32>
    %cst_31 = arith.constant 1.000000e+00 : f32
    %84 = vector.broadcast %cst_31 : f32 to vector<2x96xf32>
    %85 = arith.addf %84, %83 : vector<2x96xf32>
    %86 = arith.divf %84, %85 : vector<2x96xf32>
    %87 = vector.extract_strided_slice %86 {offsets = [0, 0], sizes = [2, 32], strides = [1, 1]} : vector<2x96xf32> to vector<2x32xf32>
    %88 = vector.extract_strided_slice %86 {offsets = [0, 32], sizes = [2, 32], strides = [1, 1]} : vector<2x96xf32> to vector<2x32xf32>
    %89 = vector.extract_strided_slice %86 {offsets = [0, 64], sizes = [2, 32], strides = [1, 1]} : vector<2x96xf32> to vector<2x32xf32>
    %90 = vector.extract_strided_slice %75 {offsets = [0, 96], sizes = [2, 32], strides = [1, 1]} : vector<2x128xf32> to vector<2x32xf32>
    %91 = math.tanh %90 : vector<2x32xf32>
    %92 = arith.mulf %88, %63 : vector<2x32xf32>
    %93 = arith.mulf %87, %91 : vector<2x32xf32>
    %94 = arith.addf %92, %93 : vector<2x32xf32>
    %95 = math.tanh %94 : vector<2x32xf32>
    %96 = arith.mulf %89, %95 : vector<2x32xf32>
    %c0_32 = arith.constant 0 : index
    %c2_33 = arith.constant 2 : index
    %c0_34 = arith.constant 0 : index
    %97 = vector.load %arg5[%c0_32, %c2_33, %c0_34] : memref<2x8x32xf32, #tpu.memory_space<vmem>>, vector<2x1x32xf32>
    %98 = vector.shape_cast %97 : vector<2x1x32xf32> to vector<2x32xf32>
    %99 = vector.shape_cast %96 : vector<2x32xf32> to vector<2x1x32xf32>
    tpu.vector_store %arg5[%c0_32, %c2_33, %c0_34], %99 {strides = array<i32>} : memref<2x8x32xf32, #tpu.memory_space<vmem>>, vector<2x1x32xf32>,
    %c0_35 = arith.constant 0 : index
    %c3 = arith.constant 3 : index
    %c0_36 = arith.constant 0 : index
    %100 = vector.load %arg2[%c0_35, %c3, %c0_36] : memref<2x8x16xf32, #tpu.memory_space<vmem>>, vector<2x1x16xf32>
    %101 = vector.shape_cast %100 : vector<2x1x16xf32> to vector<2x16xf32>
    %102 = arith.truncf %101 : vector<2x16xf32> to vector<2x16xbf16>
    %cst_37 = arith.constant dense<0.000000e+00> : vector<2x128xf32>
    %103 = tpu.matmul %102, %3, %cst_37 {dimension_numbers = #tpu.dot_dimension_numbers<[1], [0], [0], [1], [0, 0, 1, 1], [], []>} : vector<2x16xbf16>, vector<16x128xbf16>, vector<2x128xf32> -> vector<2x128xf32>
    %104 = arith.truncf %96 : vector<2x32xf32> to vector<2x32xbf16>
    %cst_38 = arith.constant dense<0.000000e+00> : vector<2x128xf32>
    %105 = tpu.matmul %104, %4, %cst_38 {dimension_numbers = #tpu.dot_dimension_numbers<[1], [0], [0], [1], [0, 0, 1, 1], [], []>} : vector<2x32xbf16>, vector<32x128xbf16>, vector<2x128xf32> -> vector<2x128xf32>
    %106 = arith.addf %103, %105 : vector<2x128xf32>
    %107 = vector.extract_strided_slice %106 {offsets = [0, 0], sizes = [2, 96], strides = [1, 1]} : vector<2x128xf32> to vector<2x96xf32>
    %108 = arith.negf %107 : vector<2x96xf32>
    %109 = math.exp %108 : vector<2x96xf32>
    %cst_39 = arith.constant 1.000000e+00 : f32
    %110 = vector.broadcast %cst_39 : f32 to vector<2x96xf32>
    %111 = arith.addf %110, %109 : vector<2x96xf32>
    %112 = arith.divf %110, %111 : vector<2x96xf32>
    %113 = arith.negf %112 : vector<2x96xf32>
    %114 = math.exp %113 : vector<2x96xf32>
    %cst_40 = arith.constant 1.000000e+00 : f32
    %115 = vector.broadcast %cst_40 : f32 to vector<2x96xf32>
    %116 = arith.addf %115, %114 : vector<2x96xf32>
    %117 = arith.divf %115, %116 : vector<2x96xf32>
    %118 = vector.extract_strided_slice %117 {offsets = [0, 0], sizes = [2, 32], strides = [1, 1]} : vector<2x96xf32> to vector<2x32xf32>
    %119 = vector.extract_strided_slice %117 {offsets = [0, 32], sizes = [2, 32], strides = [1, 1]} : vector<2x96xf32> to vector<2x32xf32>
    %120 = vector.extract_strided_slice %117 {offsets = [0, 64], sizes = [2, 32], strides = [1, 1]} : vector<2x96xf32> to vector<2x32xf32>
    %121 = vector.extract_strided_slice %106 {offsets = [0, 96], sizes = [2, 32], strides = [1, 1]} : vector<2x128xf32> to vector<2x32xf32>
    %122 = math.tanh %121 : vector<2x32xf32>
    %123 = arith.mulf %119, %94 : vector<2x32xf32>
    %124 = arith.mulf %118, %122 : vector<2x32xf32>
    %125 = arith.addf %123, %124 : vector<2x32xf32>
    %126 = math.tanh %125 : vector<2x32xf32>
    %127 = arith.mulf %120, %126 : vector<2x32xf32>
    %c0_41 = arith.constant 0 : index
    %c3_42 = arith.constant 3 : index
    %c0_43 = arith.constant 0 : index
    %128 = vector.load %arg5[%c0_41, %c3_42, %c0_43] : memref<2x8x32xf32, #tpu.memory_space<vmem>>, vector<2x1x32xf32>
    %129 = vector.shape_cast %128 : vector<2x1x32xf32> to vector<2x32xf32>
    %130 = vector.shape_cast %127 : vector<2x32xf32> to vector<2x1x32xf32>
    tpu.vector_store %arg5[%c0_41, %c3_42, %c0_43], %130 {strides = array<i32>} : memref<2x8x32xf32, #tpu.memory_space<vmem>>, vector<2x1x32xf32>,
    %c0_44 = arith.constant 0 : index
    %c4 = arith.constant 4 : index
    %c0_45 = arith.constant 0 : index
    %131 = vector.load %arg2[%c0_44, %c4, %c0_45] : memref<2x8x16xf32, #tpu.memory_space<vmem>>, vector<2x1x16xf32>
    %132 = vector.shape_cast %131 : vector<2x1x16xf32> to vector<2x16xf32>
    %133 = arith.truncf %132 : vector<2x16xf32> to vector<2x16xbf16>
    %cst_46 = arith.constant dense<0.000000e+00> : vector<2x128xf32>
    %134 = tpu.matmul %133, %3, %cst_46 {dimension_numbers = #tpu.dot_dimension_numbers<[1], [0], [0], [1], [0, 0, 1, 1], [], []>} : vector<2x16xbf16>, vector<16x128xbf16>, vector<2x128xf32> -> vector<2x128xf32>
    %135 = arith.truncf %127 : vector<2x32xf32> to vector<2x32xbf16>
    %cst_47 = arith.constant dense<0.000000e+00> : vector<2x128xf32>
    %136 = tpu.matmul %135, %4, %cst_47 {dimension_numbers = #tpu.dot_dimension_numbers<[1], [0], [0], [1], [0, 0, 1, 1], [], []>} : vector<2x32xbf16>, vector<32x128xbf16>, vector<2x128xf32> -> vector<2x128xf32>
    %137 = arith.addf %134, %136 : vector<2x128xf32>
    %138 = vector.extract_strided_slice %137 {offsets = [0, 0], sizes = [2, 96], strides = [1, 1]} : vector<2x128xf32> to vector<2x96xf32>
    %139 = arith.negf %138 : vector<2x96xf32>
    %140 = math.exp %139 : vector<2x96xf32>
    %cst_48 = arith.constant 1.000000e+00 : f32
    %141 = vector.broadcast %cst_48 : f32 to vector<2x96xf32>
    %142 = arith.addf %141, %140 : vector<2x96xf32>
    %143 = arith.divf %141, %142 : vector<2x96xf32>
    %144 = arith.negf %143 : vector<2x96xf32>
    %145 = math.exp %144 : vector<2x96xf32>
    %cst_49 = arith.constant 1.000000e+00 : f32
    %146 = vector.broadcast %cst_49 : f32 to vector<2x96xf32>
    %147 = arith.addf %146, %145 : vector<2x96xf32>
    %148 = arith.divf %146, %147 : vector<2x96xf32>
    %149 = vector.extract_strided_slice %148 {offsets = [0, 0], sizes = [2, 32], strides = [1, 1]} : vector<2x96xf32> to vector<2x32xf32>
    %150 = vector.extract_strided_slice %148 {offsets = [0, 32], sizes = [2, 32], strides = [1, 1]} : vector<2x96xf32> to vector<2x32xf32>
    %151 = vector.extract_strided_slice %148 {offsets = [0, 64], sizes = [2, 32], strides = [1, 1]} : vector<2x96xf32> to vector<2x32xf32>
    %152 = vector.extract_strided_slice %137 {offsets = [0, 96], sizes = [2, 32], strides = [1, 1]} : vector<2x128xf32> to vector<2x32xf32>
    %153 = math.tanh %152 : vector<2x32xf32>
    %154 = arith.mulf %150, %125 : vector<2x32xf32>
    %155 = arith.mulf %149, %153 : vector<2x32xf32>
    %156 = arith.addf %154, %155 : vector<2x32xf32>
    %157 = math.tanh %156 : vector<2x32xf32>
    %158 = arith.mulf %151, %157 : vector<2x32xf32>
    %c0_50 = arith.constant 0 : index
    %c4_51 = arith.constant 4 : index
    %c0_52 = arith.constant 0 : index
    %159 = vector.load %arg5[%c0_50, %c4_51, %c0_52] : memref<2x8x32xf32, #tpu.memory_space<vmem>>, vector<2x1x32xf32>
    %160 = vector.shape_cast %159 : vector<2x1x32xf32> to vector<2x32xf32>
    %161 = vector.shape_cast %158 : vector<2x32xf32> to vector<2x1x32xf32>
    tpu.vector_store %arg5[%c0_50, %c4_51, %c0_52], %161 {strides = array<i32>} : memref<2x8x32xf32, #tpu.memory_space<vmem>>, vector<2x1x32xf32>,
    %c0_53 = arith.constant 0 : index
    %c5 = arith.constant 5 : index
    %c0_54 = arith.constant 0 : index
    %162 = vector.load %arg2[%c0_53, %c5, %c0_54] : memref<2x8x16xf32, #tpu.memory_space<vmem>>, vector<2x1x16xf32>
    %163 = vector.shape_cast %162 : vector<2x1x16xf32> to vector<2x16xf32>
    %164 = arith.truncf %163 : vector<2x16xf32> to vector<2x16xbf16>
    %cst_55 = arith.constant dense<0.000000e+00> : vector<2x128xf32>
    %165 = tpu.matmul %164, %3, %cst_55 {dimension_numbers = #tpu.dot_dimension_numbers<[1], [0], [0], [1], [0, 0, 1, 1], [], []>} : vector<2x16xbf16>, vector<16x128xbf16>, vector<2x128xf32> -> vector<2x128xf32>
    %166 = arith.truncf %158 : vector<2x32xf32> to vector<2x32xbf16>
    %cst_56 = arith.constant dense<0.000000e+00> : vector<2x128xf32>
    %167 = tpu.matmul %166, %4, %cst_56 {dimension_numbers = #tpu.dot_dimension_numbers<[1], [0], [0], [1], [0, 0, 1, 1], [], []>} : vector<2x32xbf16>, vector<32x128xbf16>, vector<2x128xf32> -> vector<2x128xf32>
    %168 = arith.addf %165, %167 : vector<2x128xf32>
    %169 = vector.extract_strided_slice %168 {offsets = [0, 0], sizes = [2, 96], strides = [1, 1]} : vector<2x128xf32> to vector<2x96xf32>
    %170 = arith.negf %169 : vector<2x96xf32>
    %171 = math.exp %170 : vector<2x96xf32>
    %cst_57 = arith.constant 1.000000e+00 : f32
    %172 = vector.broadcast %cst_57 : f32 to vector<2x96xf32>
    %173 = arith.addf %172, %171 : vector<2x96xf32>
    %174 = arith.divf %172, %173 : vector<2x96xf32>
    %175 = arith.negf %174 : vector<2x96xf32>
    %176 = math.exp %175 : vector<2x96xf32>
    %cst_58 = arith.constant 1.000000e+00 : f32
    %177 = vector.broadcast %cst_58 : f32 to vector<2x96xf32>
    %178 = arith.addf %177, %176 : vector<2x96xf32>
    %179 = arith.divf %177, %178 : vector<2x96xf32>
    %180 = vector.extract_strided_slice %179 {offsets = [0, 0], sizes = [2, 32], strides = [1, 1]} : vector<2x96xf32> to vector<2x32xf32>
    %181 = vector.extract_strided_slice %179 {offsets = [0, 32], sizes = [2, 32], strides = [1, 1]} : vector<2x96xf32> to vector<2x32xf32>
    %182 = vector.extract_strided_slice %179 {offsets = [0, 64], sizes = [2, 32], strides = [1, 1]} : vector<2x96xf32> to vector<2x32xf32>
    %183 = vector.extract_strided_slice %168 {offsets = [0, 96], sizes = [2, 32], strides = [1, 1]} : vector<2x128xf32> to vector<2x32xf32>
    %184 = math.tanh %183 : vector<2x32xf32>
    %185 = arith.mulf %181, %156 : vector<2x32xf32>
    %186 = arith.mulf %180, %184 : vector<2x32xf32>
    %187 = arith.addf %185, %186 : vector<2x32xf32>
    %188 = math.tanh %187 : vector<2x32xf32>
    %189 = arith.mulf %182, %188 : vector<2x32xf32>
    %c0_59 = arith.constant 0 : index
    %c5_60 = arith.constant 5 : index
    %c0_61 = arith.constant 0 : index
    %190 = vector.load %arg5[%c0_59, %c5_60, %c0_61] : memref<2x8x32xf32, #tpu.memory_space<vmem>>, vector<2x1x32xf32>
    %191 = vector.shape_cast %190 : vector<2x1x32xf32> to vector<2x32xf32>
    %192 = vector.shape_cast %189 : vector<2x32xf32> to vector<2x1x32xf32>
    tpu.vector_store %arg5[%c0_59, %c5_60, %c0_61], %192 {strides = array<i32>} : memref<2x8x32xf32, #tpu.memory_space<vmem>>, vector<2x1x32xf32>,
    %c0_62 = arith.constant 0 : index
    %c6 = arith.constant 6 : index
    %c0_63 = arith.constant 0 : index
    %193 = vector.load %arg2[%c0_62, %c6, %c0_63] : memref<2x8x16xf32, #tpu.memory_space<vmem>>, vector<2x1x16xf32>
    %194 = vector.shape_cast %193 : vector<2x1x16xf32> to vector<2x16xf32>
    %195 = arith.truncf %194 : vector<2x16xf32> to vector<2x16xbf16>
    %cst_64 = arith.constant dense<0.000000e+00> : vector<2x128xf32>
    %196 = tpu.matmul %195, %3, %cst_64 {dimension_numbers = #tpu.dot_dimension_numbers<[1], [0], [0], [1], [0, 0, 1, 1], [], []>} : vector<2x16xbf16>, vector<16x128xbf16>, vector<2x128xf32> -> vector<2x128xf32>
    %197 = arith.truncf %189 : vector<2x32xf32> to vector<2x32xbf16>
    %cst_65 = arith.constant dense<0.000000e+00> : vector<2x128xf32>
    %198 = tpu.matmul %197, %4, %cst_65 {dimension_numbers = #tpu.dot_dimension_numbers<[1], [0], [0], [1], [0, 0, 1, 1], [], []>} : vector<2x32xbf16>, vector<32x128xbf16>, vector<2x128xf32> -> vector<2x128xf32>
    %199 = arith.addf %196, %198 : vector<2x128xf32>
    %200 = vector.extract_strided_slice %199 {offsets = [0, 0], sizes = [2, 96], strides = [1, 1]} : vector<2x128xf32> to vector<2x96xf32>
    %201 = arith.negf %200 : vector<2x96xf32>
    %202 = math.exp %201 : vector<2x96xf32>
    %cst_66 = arith.constant 1.000000e+00 : f32
    %203 = vector.broadcast %cst_66 : f32 to vector<2x96xf32>
    %204 = arith.addf %203, %202 : vector<2x96xf32>
    %205 = arith.divf %203, %204 : vector<2x96xf32>
    %206 = arith.negf %205 : vector<2x96xf32>
    %207 = math.exp %206 : vector<2x96xf32>
    %cst_67 = arith.constant 1.000000e+00 : f32
    %208 = vector.broadcast %cst_67 : f32 to vector<2x96xf32>
    %209 = arith.addf %208, %207 : vector<2x96xf32>
    %210 = arith.divf %208, %209 : vector<2x96xf32>
    %211 = vector.extract_strided_slice %210 {offsets = [0, 0], sizes = [2, 32], strides = [1, 1]} : vector<2x96xf32> to vector<2x32xf32>
    %212 = vector.extract_strided_slice %210 {offsets = [0, 32], sizes = [2, 32], strides = [1, 1]} : vector<2x96xf32> to vector<2x32xf32>
    %213 = vector.extract_strided_slice %210 {offsets = [0, 64], sizes = [2, 32], strides = [1, 1]} : vector<2x96xf32> to vector<2x32xf32>
    %214 = vector.extract_strided_slice %199 {offsets = [0, 96], sizes = [2, 32], strides = [1, 1]} : vector<2x128xf32> to vector<2x32xf32>
    %215 = math.tanh %214 : vector<2x32xf32>
    %216 = arith.mulf %212, %187 : vector<2x32xf32>
    %217 = arith.mulf %211, %215 : vector<2x32xf32>
    %218 = arith.addf %216, %217 : vector<2x32xf32>
    %219 = math.tanh %218 : vector<2x32xf32>
    %220 = arith.mulf %213, %219 : vector<2x32xf32>
    %c0_68 = arith.constant 0 : index
    %c6_69 = arith.constant 6 : index
    %c0_70 = arith.constant 0 : index
    %221 = vector.load %arg5[%c0_68, %c6_69, %c0_70] : memref<2x8x32xf32, #tpu.memory_space<vmem>>, vector<2x1x32xf32>
    %222 = vector.shape_cast %221 : vector<2x1x32xf32> to vector<2x32xf32>
    %223 = vector.shape_cast %220 : vector<2x32xf32> to vector<2x1x32xf32>
    tpu.vector_store %arg5[%c0_68, %c6_69, %c0_70], %223 {strides = array<i32>} : memref<2x8x32xf32, #tpu.memory_space<vmem>>, vector<2x1x32xf32>,
    %c0_71 = arith.constant 0 : index
    %c7 = arith.constant 7 : index
    %c0_72 = arith.constant 0 : index
    %224 = vector.load %arg2[%c0_71, %c7, %c0_72] : memref<2x8x16xf32, #tpu.memory_space<vmem>>, vector<2x1x16xf32>
    %225 = vector.shape_cast %224 : vector<2x1x16xf32> to vector<2x16xf32>
    %226 = arith.truncf %225 : vector<2x16xf32> to vector<2x16xbf16>
    %cst_73 = arith.constant dense<0.000000e+00> : vector<2x128xf32>
    %227 = tpu.matmul %226, %3, %cst_73 {dimension_numbers = #tpu.dot_dimension_numbers<[1], [0], [0], [1], [0, 0, 1, 1], [], []>} : vector<2x16xbf16>, vector<16x128xbf16>, vector<2x128xf32> -> vector<2x128xf32>
    %228 = arith.truncf %220 : vector<2x32xf32> to vector<2x32xbf16>
    %cst_74 = arith.constant dense<0.000000e+00> : vector<2x128xf32>
    %229 = tpu.matmul %228, %4, %cst_74 {dimension_numbers = #tpu.dot_dimension_numbers<[1], [0], [0], [1], [0, 0, 1, 1], [], []>} : vector<2x32xbf16>, vector<32x128xbf16>, vector<2x128xf32> -> vector<2x128xf32>
    %230 = arith.addf %227, %229 : vector<2x128xf32>
    %231 = vector.extract_strided_slice %230 {offsets = [0, 0], sizes = [2, 96], strides = [1, 1]} : vector<2x128xf32> to vector<2x96xf32>
    %232 = arith.negf %231 : vector<2x96xf32>
    %233 = math.exp %232 : vector<2x96xf32>
    %cst_75 = arith.constant 1.000000e+00 : f32
    %234 = vector.broadcast %cst_75 : f32 to vector<2x96xf32>
    %235 = arith.addf %234, %233 : vector<2x96xf32>
    %236 = arith.divf %234, %235 : vector<2x96xf32>
    %237 = arith.negf %236 : vector<2x96xf32>
    %238 = math.exp %237 : vector<2x96xf32>
    %cst_76 = arith.constant 1.000000e+00 : f32
    %239 = vector.broadcast %cst_76 : f32 to vector<2x96xf32>
    %240 = arith.addf %239, %238 : vector<2x96xf32>
    %241 = arith.divf %239, %240 : vector<2x96xf32>
    %242 = vector.extract_strided_slice %241 {offsets = [0, 0], sizes = [2, 32], strides = [1, 1]} : vector<2x96xf32> to vector<2x32xf32>
    %243 = vector.extract_strided_slice %241 {offsets = [0, 32], sizes = [2, 32], strides = [1, 1]} : vector<2x96xf32> to vector<2x32xf32>
    %244 = vector.extract_strided_slice %241 {offsets = [0, 64], sizes = [2, 32], strides = [1, 1]} : vector<2x96xf32> to vector<2x32xf32>
    %245 = vector.extract_strided_slice %230 {offsets = [0, 96], sizes = [2, 32], strides = [1, 1]} : vector<2x128xf32> to vector<2x32xf32>
    %246 = math.tanh %245 : vector<2x32xf32>
    %247 = arith.mulf %243, %218 : vector<2x32xf32>
    %248 = arith.mulf %242, %246 : vector<2x32xf32>
    %249 = arith.addf %247, %248 : vector<2x32xf32>
    %250 = math.tanh %249 : vector<2x32xf32>
    %251 = arith.mulf %244, %250 : vector<2x32xf32>
    %c0_77 = arith.constant 0 : index
    %c7_78 = arith.constant 7 : index
    %c0_79 = arith.constant 0 : index
    %252 = vector.load %arg5[%c0_77, %c7_78, %c0_79] : memref<2x8x32xf32, #tpu.memory_space<vmem>>, vector<2x1x32xf32>
    %253 = vector.shape_cast %252 : vector<2x1x32xf32> to vector<2x32xf32>
    %254 = vector.shape_cast %251 : vector<2x32xf32> to vector<2x1x32xf32>
    tpu.vector_store %arg5[%c0_77, %c7_78, %c0_79], %254 {strides = array<i32>} : memref<2x8x32xf32, #tpu.memory_space<vmem>>, vector<2x1x32xf32>,
    %c0_80 = arith.constant 0 : index
    %c0_81 = arith.constant 0 : index
    %255 = vector.load %arg6[%c0_80, %c0_81] : memref<2x32xf32, #tpu.memory_space<vmem>>, vector<2x32xf32>
    tpu.vector_store %arg6[%c0_80, %c0_81], %251 {strides = array<i32>} : memref<2x32xf32, #tpu.memory_space<vmem>>, vector<2x32xf32>,
    %c0_82 = arith.constant 0 : index
    %c0_83 = arith.constant 0 : index
    %256 = vector.load %arg7[%c0_82, %c0_83] : memref<2x32xf32, #tpu.memory_space<vmem>>, vector<2x32xf32>
    tpu.vector_store %arg7[%c0_82, %c0_83], %249 {strides = array<i32>} : memref<2x32xf32, #tpu.memory_space<vmem>>, vector<2x32xf32>,
    return
  }
  func.func @transform_0(%arg0: i32, %arg1: i32) -> (i32, i32, i32) {
    %c0_i32 = arith.constant 0 : i32
    %c0_i32_0 = arith.constant 0 : i32
    return %arg0, %arg1, %c0_i32 : i32, i32, i32
  }
  func.func @transform_1(%arg0: i32, %arg1: i32) -> (i32, i32) {
    %c0_i32 = arith.constant 0 : i32
    %c0_i32_0 = arith.constant 0 : i32
    %c0_i32_1 = arith.constant 0 : i32
    return %c0_i32, %c0_i32_0 : i32, i32
  }
  func.func @transform_2(%arg0: i32, %arg1: i32) -> (i32, i32) {
    %c0_i32 = arith.constant 0 : i32
    %c0_i32_0 = arith.constant 0 : i32
    %c0_i32_1 = arith.constant 0 : i32
    return %c0_i32, %c0_i32_0 : i32, i32
  }
  func.func @transform_3(%arg0: i32, %arg1: i32) -> (i32, i32, i32) {
    %c0_i32 = arith.constant 0 : i32
    %c0_i32_0 = arith.constant 0 : i32
    return %arg0, %arg1, %c0_i32 : i32, i32, i32
  }
  func.func @transform_4(%arg0: i32, %arg1: i32) -> (i32, i32) {
    %c0_i32 = arith.constant 0 : i32
    %c0_i32_0 = arith.constant 0 : i32
    return %arg0, %c0_i32 : i32, i32
  }
  func.func @transform_5(%arg0: i32, %arg1: i32) -> (i32, i32) {
    %c0_i32 = arith.constant 0 : i32
    %c0_i32_0 = arith.constant 0 : i32
    return %arg0, %c0_i32 : i32, i32
  }
}

</mosaic_0001>

<llo_original>
// kernel: lstm_cell_forward.1
$region0: #{lstm_cell_forward.1}
  #allocation0 [shape = 'u32[]', space=smem, size = 0x4, offset = 0x4, fixed_abs, tag = 'smem constant byte address 0x4 - core index']
  #allocation1 [shape = 'u32[144,128]{1,0:T(1,128)}', space=vmem, size = 0x12000, scoped, tag = 'internal scratch']
  %s0 = inlined_call_operand.vmem [shape: f32[2,8,16], index: 0, kind: input, shape index: {}]
  %s1 = inlined_call_operand.vmem [shape: bf16[16,128], index: 1, kind: input, shape index: {}]
  %s2 = inlined_call_operand.vmem [shape: bf16[32,128], index: 2, kind: input, shape index: {}]
  %s3 = inlined_call_operand.hbm [shape: f32[2,8,32], index: 3, kind: output, shape index: {0}]
  %s4 = inlined_call_operand.hbm [shape: f32[2,32], index: 4, kind: output, shape index: {1}]
  %s5 = inlined_call_operand.hbm [shape: f32[2,32], index: 5, kind: output, shape index: {2}]
  %6 = xla_tuple %s3, %s4, %s5
  %s7 = sld [smem:[#allocation0]]
  $region42: #{lstm_cell_forward.1} parent=0
    _
  %s9 = ssub.s32 1, %s7
  %s10 = scalar_select 0, %s9, %s7
  $region1: #{lstm_cell_forward.1} parent=0
    #allocation2 [shape = 'u8[8192]{0}', space=vmem, size = 0x2000, scoped, tag = 'output window, operand 0, single buffered']
    #allocation3 [shape = 's32[1]{0}', space=sflag, size = 0x4, scoped, tag = 'scoped memory for lstm_cell_forward.1']
    #allocation4 [shape = 'u8[1024]{0}', space=vmem, size = 0x400, scoped, tag = 'output window, operand 1, single buffered']
    #allocation5 [shape = 's32[1]{0}', space=sflag, size = 0x4, scoped, tag = 'scoped memory for lstm_cell_forward.1']
    #allocation6 [shape = 'u8[1024]{0}', space=vmem, size = 0x400, scoped, tag = 'output window, operand 2, single buffered']
    %11 = vsyncpa [#allocation3], 0
    %12 = vsyncpa [#allocation5], 0
    // Predicated region
    $region2: #{lstm_cell_forward.1} parent=1 // pred_check
      _
    $region3: #{lstm_cell_forward.1} parent=1 // pred_check_branch
      %14 = sbr.rel (0) target = $region5
    $region4: #{lstm_cell_forward.1} parent=1 // pred_region
      _
    $region5: #{lstm_cell_forward.1} parent=1 // pred_fallthru
      _
    // Predicated region
    $region6: #{lstm_cell_forward.1} parent=1 // pred_check
      _
    $region7: #{lstm_cell_forward.1} parent=1 // pred_check_branch
      %16 = sbr.rel (0) target = $region9
    $region8: #{lstm_cell_forward.1} parent=1 // pred_region
      _
    $region9: #{lstm_cell_forward.1} parent=1 // pred_fallthru
      _
    // Predicated region
    $region10: #{lstm_cell_forward.1} parent=1 // pred_check
      _
    $region11: #{lstm_cell_forward.1} parent=1 // pred_check_branch
      %18 = sbr.rel (0) target = $region13
    $region12: #{lstm_cell_forward.1} parent=1 // pred_region
      _
    $region13: #{lstm_cell_forward.1} parent=1 // pred_fallthru
      _
    %p20 = scmp.eq.s32.totalorder 0, 0
    // Predicated region
    $region14: #{lstm_cell_forward.1} parent=1 // pred_check
      %p21 = pneg %p20
    $region15: #{lstm_cell_forward.1} parent=1 // pred_check_branch
      %23 = sbr.rel (%p21) target = $region17
    $region16: #{lstm_cell_forward.1} parent=1 // pred_region
      %vm24 = vcmask 254976
      %25 = vst.msk [vmem:[#allocation4] sm:$0x3] %vm24, 0.0
      %26 = vst.msk [vmem:[#allocation6] sm:$0x3] %vm24, 0.0
    $region17: #{lstm_cell_forward.1} parent=1 // pred_fallthru
      _
    %v27 = vld [vmem:[%s1] sm:$0xf]
    %v28 = vld [vmem:[%s1 + $0x4] sm:$0xf]
    %v29 = vld [vmem:[%s2] sm:$0xf]
    %v30 = vld [vmem:[%s2 + $0x4] sm:$0xf]
    %v31 = vld [vmem:[%s2 + $0x8] sm:$0xf]
    %v32 = vld [vmem:[%s2 + $0xc] sm:$0xf]
    %v33 = vld [vmem:[#allocation4] sm:$0x3]
    %v34 = vld [vmem:[#allocation6] sm:$0x3]
    %v35 = vld [vmem:[%s0] sm:$0x1]
    %v36 = vld [vmem:[%s0 + $0x8] sm:$0x1]
    %v37 = vpack.c.bf16 %v35, %v35
    %v38 = vpack.c.bf16 %v36, %v36
    %v39 = vpack.c.bf16 %v33, %v33
    %v44 = vunpack.c.l.b16 %v29
    %v45 = vunpack.c.l.b16 %v30
    %v46 = vunpack.c.l.b16 %v31
    %v47 = vunpack.c.l.b16 %v32
    %v48 = vpack.c.b16 %v45, %v44
    %v49 = vpack.c.b16 %v47, %v46
    %vm52 = vcmask 261120
    %v54 = vsel %vm52, %v39, 0
    %56 = vmatprep.subr.bf16.mxu0 0
    %57 = vmatpush1.bf16.msra.mxu0 %v48
    %58 = vmatprep.subr.bf16.mxu0 0
    %59 = vmatpush1.bf16.msra.mxu0 %v49
    %60 = vmatprep.subr.bf16.mxu0 0
    %61 = vmatpush1.bf16.msra.mxu0 0
    %62 = vmatprep.subr.bf16.mxu0 0
    %63 = vmatpush1.bf16.msra.mxu0 0
    %64 = vmatprep.subr.bf16.mxu0 0
    %65 = vmatpush1.bf16.msra.mxu0 0
    %66 = vmatprep.subr.bf16.mxu0 0
    %67 = vmatpush1.bf16.msra.mxu0 0
    %68 = vmatprep.subr.bf16.mxu0 0
    %69 = vmatpush1.bf16.msra.mxu0 0
    %70 = vmatprep.subr.bf16.mxu0 0
    %71 = vmatpush1.bf16.msra.mxu0 0
    %72 = vmatprep.subr.bf16.mxu0 0
    %73 = vmatpush1.bf16.msra.mxu0 0
    %74 = vmatprep.subr.bf16.mxu0 0
    %75 = vmatpush1.bf16.msra.mxu0 0
    %76 = vmatprep.subr.bf16.mxu0 0
    %77 = vmatpush1.bf16.msra.mxu0 0
    %78 = vmatprep.subr.bf16.mxu0 0
    %79 = vmatpush1.bf16.msra.mxu0 0
    %80 = vmatprep.subr.bf16.mxu0 0
    %81 = vmatpush1.bf16.msra.mxu0 0
    %82 = vmatprep.subr.bf16.mxu0 0
    %83 = vmatpush1.bf16.msra.mxu0 0
    %84 = vmatprep.subr.bf16.mxu0 0
    %85 = vmatpush1.bf16.msra.mxu0 0
    %86 = vmatprep.subr.bf16.mxu0 0
    %87 = vmatpush1.bf16.msra.mxu0 0
    %88 = vmatprep.mubr.bf16.mxu0 0
    %89 = vmatmul.mubr.bf16.gmra.mrb[0].mxu0 %v54
    %v90 = vpop.f32.mrb[0].mxu0
    %v91 = vadd.f32 0.0, %v90
    %v92 = vpop.f32.mrb[0].mxu0
    %v93 = vpop.f32.mrb[0].mxu0
    %v94 = vpop.f32.mrb[0].mxu0
    %95 = vdwg.mxu0
    %v98 = vunpack.c.l.b16 %v37
    %v99 = vunpack.c.l.b16 %v38
    %v100 = vrot.slane %v99, 7
    %vm101 = vcmask 1041409
    %v102 = vsel %vm101, %v100, %v98
    %v103 = vpack.c.b16 %v102, %v102
    %v106 = vunpack.c.l.b16 %v27
    %v107 = vunpack.c.l.b16 %v28
    %v108 = vpack.c.b16 %v107, %v106
    %vm110 = vcmask 130048
    %v112 = vsel %vm110, %v103, 0
    %114 = vmatprep.subr.bf16.mxu0 0
    %115 = vmatpush1.bf16.msra.mxu0 %v108
    %116 = vmatprep.subr.bf16.mxu0 0
    %117 = vmatpush1.bf16.msra.mxu0 0
    %118 = vmatprep.subr.bf16.mxu0 0
    %119 = vmatpush1.bf16.msra.mxu0 0
    %120 = vmatprep.subr.bf16.mxu0 0
    %121 = vmatpush1.bf16.msra.mxu0 0
    %122 = vmatprep.subr.bf16.mxu0 0
    %123 = vmatpush1.bf16.msra.mxu0 0
    %124 = vmatprep.subr.bf16.mxu0 0
    %125 = vmatpush1.bf16.msra.mxu0 0
    %126 = vmatprep.subr.bf16.mxu0 0
    %127 = vmatpush1.bf16.msra.mxu0 0
    %128 = vmatprep.subr.bf16.mxu0 0
    %129 = vmatpush1.bf16.msra.mxu0 0
    %130 = vmatprep.subr.bf16.mxu0 0
    %131 = vmatpush1.bf16.msra.mxu0 0
    %132 = vmatprep.subr.bf16.mxu0 0
    %133 = vmatpush1.bf16.msra.mxu0 0
    %134 = vmatprep.subr.bf16.mxu0 0
    %135 = vmatpush1.bf16.msra.mxu0 0
    %136 = vmatprep.subr.bf16.mxu0 0
    %137 = vmatpush1.bf16.msra.mxu0 0
    %138 = vmatprep.subr.bf16.mxu0 0
    %139 = vmatpush1.bf16.msra.mxu0 0
    %140 = vmatprep.subr.bf16.mxu0 0
    %141 = vmatpush1.bf16.msra.mxu0 0
    %142 = vmatprep.subr.bf16.mxu0 0
    %143 = vmatpush1.bf16.msra.mxu0 0
    %144 = vmatprep.subr.bf16.mxu0 0
    %145 = vmatpush1.bf16.msra.mxu0 0
    %146 = vmatprep.mubr.bf16.mxu0 0
    %147 = vmatmul.mubr.bf16.gmra.mrb[0].mxu0 %v112
    %v148 = vpop.f32.mrb[0].mxu0
    %v149 = vadd.f32 %v91, %v148
    %v150 = vpop.f32.mrb[0].mxu0
    %v151 = vpop.f32.mrb[0].mxu0
    %v152 = vpop.f32.mrb[0].mxu0
    %153 = vdwg.mxu0
    %v154 = vxor.u32 %v149, 2147483648
    %v155 = vmul.f32 %v154, 1.442695
    %v156 = vpow.pop %v155
    %v157 = vadd.f32 %v156, 1.0
    %v158 = vrcp.pop %v157
    %v159 = vmul.f32 1.0, %v158
    %v160 = vxor.u32 %v159, 2147483648
    %v161 = vmul.f32 %v160, 1.442695
    %v162 = vpow.pop %v161
    %v163 = vadd.f32 %v162, 1.0
    %v164 = vrcp.pop %v163
    %v165 = vmul.f32 1.0, %v164
    %v166 = vtanh.pop %v149
    %168 = vrot.lane.b32.xlu0 %v34, 32
    %v169 = vpop.permute.xlu0 %168
    %v171 = vmul.f32 %v165, %v169
    %173 = vrot.lane.b32.xlu0 %v166, 32
    %v174 = vpop.permute.xlu0 %173
    %v176 = vmul.f32 %v165, %v174
    %178 = vrot.lane.b32.xlu0 %v176, 32
    %v179 = vpop.permute.xlu0 %178
    %v181 = vadd.f32 %v171, %v179
    %v182 = vtanh.pop %v181
    %184 = vrot.lane.b32.xlu0 %v182, 32
    %v185 = vpop.permute.xlu0 %184
    %v187 = vmul.f32 %v165, %v185
    %v190 = vunpack.c.l.s4 1966171168
    %v191 = vunpack.c.0.s8 %v190
    %v192 = vlaneseq
    %v193 = vshrl.u32 %v192, 7
    %v194 = vsub.s32 %v191, %v193
    %v195 = vrot.slane %v187, %v194
    %v196 = vcombine.high %v195, %v195
    %v198 = vunpack.c.l.s4 1966171168
    %v199 = vunpack.c.0.s8 %v198
    %v200 = vlaneseq
    %v201 = vshrl.u32 %v200, 7
    %v202 = vsub.s32 %v199, %v201
    %v203 = vrot.slane %v195, %v202
    %v205 = vunpack.c.l.s4 1966171168
    %v206 = vunpack.c.0.s8 %v205
    %v207 = vlaneseq
    %v208 = vshrl.u32 %v207, 7
    %v209 = vsub.s32 %v206, %v208
    %v210 = vrot.slane %v196, %v209
    %v211 = vlaneseq
    %v212 = vshrl.u32 %v211, 7
    %v213 = vsub.s32 0, %v212
    %v214 = vrot.slane %v203, %v213
    %v215 = vlaneseq
    %v216 = vshrl.u32 %v215, 7
    %v217 = vsub.s32 0, %v216
    %v218 = vrot.slane %v210, %v217
    %219 = vrot.lane.b32.xlu0 %v214, 64
    %v220 = vpop.permute.xlu0 %219
    %221 = vrot.lane.b32.xlu0 %v218, 64
    %v222 = vpop.permute.xlu0 %221
    %vm225 = vcmask 253952
    %226 = vst.msk [vmem:[#allocation2] sm:$0x1] %vm225, %v220
    %227 = vst.msk [vmem:[#allocation2 + $0x8] sm:$0x1] %vm225, %v222
    %v228 = vld [vmem:[%s0 + $0x1] sm:$0x1]
    %v229 = vld [vmem:[%s0 + $0x9] sm:$0x1]
    %v230 = vpack.c.bf16 %v228, %v228
    %v231 = vpack.c.bf16 %v229, %v229
    %v232 = vpack.c.bf16 %v187, %v187
    %234 = vrot.lane.b32.xlu0 %v232, 64
    %v235 = vpop.permute.xlu0 %234
    %v237 = vsel %vm52, %v235, 0
    %239 = vmatprep.subr.bf16.mxu0 0
    %240 = vmatpush1.bf16.msra.mxu0 %v48
    %241 = vmatprep.subr.bf16.mxu0 0
    %242 = vmatpush1.bf16.msra.mxu0 %v49
    %243 = vmatprep.subr.bf16.mxu0 0
    %244 = vmatpush1.bf16.msra.mxu0 0
    %245 = vmatprep.subr.bf16.mxu0 0
    %246 = vmatpush1.bf16.msra.mxu0 0
    %247 = vmatprep.subr.bf16.mxu0 0
    %248 = vmatpush1.bf16.msra.mxu0 0
    %249 = vmatprep.subr.bf16.mxu0 0
    %250 = vmatpush1.bf16.msra.mxu0 0
    %251 = vmatprep.subr.bf16.mxu0 0
    %252 = vmatpush1.bf16.msra.mxu0 0
    %253 = vmatprep.subr.bf16.mxu0 0
    %254 = vmatpush1.bf16.msra.mxu0 0
    %255 = vmatprep.subr.bf16.mxu0 0
    %256 = vmatpush1.bf16.msra.mxu0 0
    %257 = vmatprep.subr.bf16.mxu0 0
    %258 = vmatpush1.bf16.msra.mxu0 0
    %259 = vmatprep.subr.bf16.mxu0 0
    %260 = vmatpush1.bf16.msra.mxu0 0
    %261 = vmatprep.subr.bf16.mxu0 0
    %262 = vmatpush1.bf16.msra.mxu0 0
    %263 = vmatprep.subr.bf16.mxu0 0
    %264 = vmatpush1.bf16.msra.mxu0 0
    %265 = vmatprep.subr.bf16.mxu0 0
    %266 = vmatpush1.bf16.msra.mxu0 0
    %267 = vmatprep.subr.bf16.mxu0 0
    %268 = vmatpush1.bf16.msra.mxu0 0
    %269 = vmatprep.subr.bf16.mxu0 0
    %270 = vmatpush1.bf16.msra.mxu0 0
    %271 = vmatprep.mubr.bf16.mxu0 0
    %272 = vmatmul.mubr.bf16.gmra.mrb[0].mxu0 %v237
    %v273 = vpop.f32.mrb[0].mxu0
    %v274 = vadd.f32 0.0, %v273
    %v275 = vpop.f32.mrb[0].mxu0
    %v276 = vpop.f32.mrb[0].mxu0
    %v277 = vpop.f32.mrb[0].mxu0
    %278 = vdwg.mxu0
    %v281 = vunpack.c.l.b16 %v230
    %v282 = vunpack.c.l.b16 %v231
    %v283 = vrot.slane %v282, 7
    %v284 = vsel %vm101, %v283, %v281
    %v285 = vpack.c.b16 %v284, %v284
    %v287 = vsel %vm110, %v285, 0
    %289 = vmatprep.subr.bf16.mxu0 0
    %290 = vmatpush1.bf16.msra.mxu0 %v108
    %291 = vmatprep.subr.bf16.mxu0 0
    %292 = vmatpush1.bf16.msra.mxu0 0
    %293 = vmatprep.subr.bf16.mxu0 0
    %294 = vmatpush1.bf16.msra.mxu0 0
    %295 = vmatprep.subr.bf16.mxu0 0
    %296 = vmatpush1.bf16.msra.mxu0 0
    %297 = vmatprep.subr.bf16.mxu0 0
    %298 = vmatpush1.bf16.msra.mxu0 0
    %299 = vmatprep.subr.bf16.mxu0 0
    %300 = vmatpush1.bf16.msra.mxu0 0
    %301 = vmatprep.subr.bf16.mxu0 0
    %302 = vmatpush1.bf16.msra.mxu0 0
    %303 = vmatprep.subr.bf16.mxu0 0
    %304 = vmatpush1.bf16.msra.mxu0 0
    %305 = vmatprep.subr.bf16.mxu0 0
    %306 = vmatpush1.bf16.msra.mxu0 0
    %307 = vmatprep.subr.bf16.mxu0 0
    %308 = vmatpush1.bf16.msra.mxu0 0
    %309 = vmatprep.subr.bf16.mxu0 0
    %310 = vmatpush1.bf16.msra.mxu0 0
    %311 = vmatprep.subr.bf16.mxu0 0
    %312 = vmatpush1.bf16.msra.mxu0 0
    %313 = vmatprep.subr.bf16.mxu0 0
    %314 = vmatpush1.bf16.msra.mxu0 0
    %315 = vmatprep.subr.bf16.mxu0 0
    %316 = vmatpush1.bf16.msra.mxu0 0
    %317 = vmatprep.subr.bf16.mxu0 0
    %318 = vmatpush1.bf16.msra.mxu0 0
    %319 = vmatprep.subr.bf16.mxu0 0
    %320 = vmatpush1.bf16.msra.mxu0 0
    %321 = vmatprep.mubr.bf16.mxu0 0
    %322 = vmatmul.mubr.bf16.gmra.mrb[0].mxu0 %v287
    %v323 = vpop.f32.mrb[0].mxu0
    %v324 = vadd.f32 %v274, %v323
    %v325 = vpop.f32.mrb[0].mxu0
    %v326 = vpop.f32.mrb[0].mxu0
    %v327 = vpop.f32.mrb[0].mxu0
    %328 = vdwg.mxu0
    %v329 = vxor.u32 %v324, 2147483648
    %v330 = vmul.f32 %v329, 1.442695
    %v331 = vpow.pop %v330
    %v332 = vadd.f32 %v331, 1.0
    %v333 = vrcp.pop %v332
    %v334 = vmul.f32 1.0, %v333
    %v335 = vxor.u32 %v334, 2147483648
    %v336 = vmul.f32 %v335, 1.442695
    %v337 = vpow.pop %v336
    %v338 = vadd.f32 %v337, 1.0
    %v339 = vrcp.pop %v338
    %v340 = vmul.f32 1.0, %v339
    %v341 = vtanh.pop %v324
    %v342 = vmul.f32 %v340, %v181
    %344 = vrot.lane.b32.xlu0 %v341, 32
    %v345 = vpop.permute.xlu0 %344
    %v347 = vmul.f32 %v340, %v345
    %349 = vrot.lane.b32.xlu0 %v347, 32
    %v350 = vpop.permute.xlu0 %349
    %v352 = vadd.f32 %v342, %v350
    %v353 = vtanh.pop %v352
    %355 = vrot.lane.b32.xlu0 %v353, 32
    %v356 = vpop.permute.xlu0 %355
    %v358 = vmul.f32 %v340, %v356
    %v361 = vunpack.c.l.s4 1966171168
    %v362 = vunpack.c.0.s8 %v361
    %v363 = vlaneseq
    %v364 = vshrl.u32 %v363, 7
    %v365 = vsub.s32 %v362, %v364
    %v366 = vrot.slane %v358, %v365
    %v367 = vcombine.high %v366, %v366
    %v369 = vunpack.c.l.s4 1966171168
    %v370 = vunpack.c.0.s8 %v369
    %v371 = vlaneseq
    %v372 = vshrl.u32 %v371, 7
    %v373 = vsub.s32 %v370, %v372
    %v374 = vrot.slane %v366, %v373
    %v376 = vunpack.c.l.s4 1966171168
    %v377 = vunpack.c.0.s8 %v376
    %v378 = vlaneseq
    %v379 = vshrl.u32 %v378, 7
    %v380 = vsub.s32 %v377, %v379
    %v381 = vrot.slane %v367, %v380
    %v382 = vlaneseq
    %v383 = vshrl.u32 %v382, 7
    %v384 = vsub.s32 0, %v383
    %v385 = vrot.slane %v374, %v384
    %v386 = vlaneseq
    %v387 = vshrl.u32 %v386, 7
    %v388 = vsub.s32 0, %v387
    %v389 = vrot.slane %v381, %v388
    %390 = vrot.lane.b32.xlu0 %v385, 64
    %v391 = vpop.permute.xlu0 %390
    %392 = vrot.lane.b32.xlu0 %v389, 64
    %v393 = vpop.permute.xlu0 %392
    %396 = vst.msk [vmem:[#allocation2 + $0x1] sm:$0x1] %vm225, %v391
    %397 = vst.msk [vmem:[#allocation2 + $0x9] sm:$0x1] %vm225, %v393
    %v398 = vld [vmem:[%s0 + $0x2] sm:$0x1]
    %v399 = vld [vmem:[%s0 + $0xa] sm:$0x1]
    %v400 = vpack.c.bf16 %v398, %v398
    %v401 = vpack.c.bf16 %v399, %v399
    %v402 = vpack.c.bf16 %v358, %v358
    %404 = vrot.lane.b32.xlu0 %v402, 64
    %v405 = vpop.permute.xlu0 %404
    %v407 = vsel %vm52, %v405, 0
    %409 = vmatprep.subr.bf16.mxu0 0
    %410 = vmatpush1.bf16.msra.mxu0 %v48
    %411 = vmatprep.subr.bf16.mxu0 0
    %412 = vmatpush1.bf16.msra.mxu0 %v49
    %413 = vmatprep.subr.bf16.mxu0 0
    %414 = vmatpush1.bf16.msra.mxu0 0
    %415 = vmatprep.subr.bf16.mxu0 0
    %416 = vmatpush1.bf16.msra.mxu0 0
    %417 = vmatprep.subr.bf16.mxu0 0
    %418 = vmatpush1.bf16.msra.mxu0 0
    %419 = vmatprep.subr.bf16.mxu0 0
    %420 = vmatpush1.bf16.msra.mxu0 0
    %421 = vmatprep.subr.bf16.mxu0 0
    %422 = vmatpush1.bf16.msra.mxu0 0
    %423 = vmatprep.subr.bf16.mxu0 0
    %424 = vmatpush1.bf16.msra.mxu0 0
    %425 = vmatprep.subr.bf16.mxu0 0
    %426 = vmatpush1.bf16.msra.mxu0 0
    %427 = vmatprep.subr.bf16.mxu0 0
    %428 = vmatpush1.bf16.msra.mxu0 0
    %429 = vmatprep.subr.bf16.mxu0 0
    %430 = vmatpush1.bf16.msra.mxu0 0
    %431 = vmatprep.subr.bf16.mxu0 0
    %432 = vmatpush1.bf16.msra.mxu0 0
    %433 = vmatprep.subr.bf16.mxu0 0
    %434 = vmatpush1.bf16.msra.mxu0 0
    %435 = vmatprep.subr.bf16.mxu0 0
    %436 = vmatpush1.bf16.msra.mxu0 0
    %437 = vmatprep.subr.bf16.mxu0 0
    %438 = vmatpush1.bf16.msra.mxu0 0
    %439 = vmatprep.subr.bf16.mxu0 0
    %440 = vmatpush1.bf16.msra.mxu0 0
    %441 = vmatprep.mubr.bf16.mxu0 0
    %442 = vmatmul.mubr.bf16.gmra.mrb[0].mxu0 %v407
    %v443 = vpop.f32.mrb[0].mxu0
    %v444 = vadd.f32 0.0, %v443
    %v445 = vpop.f32.mrb[0].mxu0
    %v446 = vpop.f32.mrb[0].mxu0
    %v447 = vpop.f32.mrb[0].mxu0
    %448 = vdwg.mxu0
    %v451 = vunpack.c.l.b16 %v400
    %v452 = vunpack.c.l.b16 %v401
    %v453 = vrot.slane %v452, 7
    %v454 = vsel %vm101, %v453, %v451
    %v455 = vpack.c.b16 %v454, %v454
    %v457 = vsel %vm110, %v455, 0
    %459 = vmatprep.subr.bf16.mxu0 0
    %460 = vmatpush1.bf16.msra.mxu0 %v108
    %461 = vmatprep.subr.bf16.mxu0 0
    %462 = vmatpush1.bf16.msra.mxu0 0
    %463 = vmatprep.subr.bf16.mxu0 0
    %464 = vmatpush1.bf16.msra.mxu0 0
    %465 = vmatprep.subr.bf16.mxu0 0
    %466 = vmatpush1.bf16.msra.mxu0 0
    %467 = vmatprep.subr.bf16.mxu0 0
    %468 = vmatpush1.bf16.msra.mxu0 0
    %469 = vmatprep.subr.bf16.mxu0 0
    %470 = vmatpush1.bf16.msra.mxu0 0
    %471 = vmatprep.subr.bf16.mxu0 0
    %472 = vmatpush1.bf16.msra.mxu0 0
    %473 = vmatprep.subr.bf16.mxu0 0
    %474 = vmatpush1.bf16.msra.mxu0 0
    %475 = vmatprep.subr.bf16.mxu0 0
    %476 = vmatpush1.bf16.msra.mxu0 0
    %477 = vmatprep.subr.bf16.mxu0 0
    %478 = vmatpush1.bf16.msra.mxu0 0
    %479 = vmatprep.subr.bf16.mxu0 0
    %480 = vmatpush1.bf16.msra.mxu0 0
    %481 = vmatprep.subr.bf16.mxu0 0
    %482 = vmatpush1.bf16.msra.mxu0 0
    %483 = vmatprep.subr.bf16.mxu0 0
    %484 = vmatpush1.bf16.msra.mxu0 0
    %485 = vmatprep.subr.bf16.mxu0 0
    %486 = vmatpush1.bf16.msra.mxu0 0
    %487 = vmatprep.subr.bf16.mxu0 0
    %488 = vmatpush1.bf16.msra.mxu0 0
    %489 = vmatprep.subr.bf16.mxu0 0
    %490 = vmatpush1.bf16.msra.mxu0 0
    %491 = vmatprep.mubr.bf16.mxu0 0
    %492 = vmatmul.mubr.bf16.gmra.mrb[0].mxu0 %v457
    %v493 = vpop.f32.mrb[0].mxu0
    %v494 = vadd.f32 %v444, %v493
    %v495 = vpop.f32.mrb[0].mxu0
    %v496 = vpop.f32.mrb[0].mxu0
    %v497 = vpop.f32.mrb[0].mxu0
    %498 = vdwg.mxu0
    %v499 = vxor.u32 %v494, 2147483648
    %v500 = vmul.f32 %v499, 1.442695
    %v501 = vpow.pop %v500
    %v502 = vadd.f32 %v501, 1.0
    %v503 = vrcp.pop %v502
    %v504 = vmul.f32 1.0, %v503
    %v505 = vxor.u32 %v504, 2147483648
    %v506 = vmul.f32 %v505, 1.442695
    %v507 = vpow.pop %v506
    %v508 = vadd.f32 %v507, 1.0
    %v509 = vrcp.pop %v508
    %v510 = vmul.f32 1.0, %v509
    %v511 = vtanh.pop %v494
    %v512 = vmul.f32 %v510, %v352
    %514 = vrot.lane.b32.xlu0 %v511, 32
    %v515 = vpop.permute.xlu0 %514
    %v517 = vmul.f32 %v510, %v515
    %519 = vrot.lane.b32.xlu0 %v517, 32
    %v520 = vpop.permute.xlu0 %519
    %v522 = vadd.f32 %v512, %v520
    %v523 = vtanh.pop %v522
    %525 = vrot.lane.b32.xlu0 %v523, 32
    %v526 = vpop.permute.xlu0 %525
    %v528 = vmul.f32 %v510, %v526
    %v531 = vunpack.c.l.s4 1966171168
    %v532 = vunpack.c.0.s8 %v531
    %v533 = vlaneseq
    %v534 = vshrl.u32 %v533, 7
    %v535 = vsub.s32 %v532, %v534
    %v536 = vrot.slane %v528, %v535
    %v537 = vcombine.high %v536, %v536
    %v539 = vunpack.c.l.s4 1966171168
    %v540 = vunpack.c.0.s8 %v539
    %v541 = vlaneseq
    %v542 = vshrl.u32 %v541, 7
    %v543 = vsub.s32 %v540, %v542
    %v544 = vrot.slane %v536, %v543
    %v546 = vunpack.c.l.s4 1966171168
    %v547 = vunpack.c.0.s8 %v546
    %v548 = vlaneseq
    %v549 = vshrl.u32 %v548, 7
    %v550 = vsub.s32 %v547, %v549
    %v551 = vrot.slane %v537, %v550
    %v552 = vlaneseq
    %v553 = vshrl.u32 %v552, 7
    %v554 = vsub.s32 0, %v553
    %v555 = vrot.slane %v544, %v554
    %v556 = vlaneseq
    %v557 = vshrl.u32 %v556, 7
    %v558 = vsub.s32 0, %v557
    %v559 = vrot.slane %v551, %v558
    %560 = vrot.lane.b32.xlu0 %v555, 64
    %v561 = vpop.permute.xlu0 %560
    %562 = vrot.lane.b32.xlu0 %v559, 64
    %v563 = vpop.permute.xlu0 %562
    %566 = vst.msk [vmem:[#allocation2 + $0x2] sm:$0x1] %vm225, %v561
    %567 = vst.msk [vmem:[#allocation2 + $0xa] sm:$0x1] %vm225, %v563
    %v568 = vld [vmem:[%s0 + $0x3] sm:$0x1]
    %v569 = vld [vmem:[%s0 + $0xb] sm:$0x1]
    %v570 = vpack.c.bf16 %v568, %v568
    %v571 = vpack.c.bf16 %v569, %v569
    %v572 = vpack.c.bf16 %v528, %v528
    %574 = vrot.lane.b32.xlu0 %v572, 64
    %v575 = vpop.permute.xlu0 %574
    %v577 = vsel %vm52, %v575, 0
    %579 = vmatprep.subr.bf16.mxu0 0
    %580 = vmatpush1.bf16.msra.mxu0 %v48
    %581 = vmatprep.subr.bf16.mxu0 0
    %582 = vmatpush1.bf16.msra.mxu0 %v49
    %583 = vmatprep.subr.bf16.mxu0 0
    %584 = vmatpush1.bf16.msra.mxu0 0
    %585 = vmatprep.subr.bf16.mxu0 0
    %586 = vmatpush1.bf16.msra.mxu0 0
    %587 = vmatprep.subr.bf16.mxu0 0
    %588 = vmatpush1.bf16.msra.mxu0 0
    %589 = vmatprep.subr.bf16.mxu0 0
    %590 = vmatpush1.bf16.msra.mxu0 0
    %591 = vmatprep.subr.bf16.mxu0 0
    %592 = vmatpush1.bf16.msra.mxu0 0
    %593 = vmatprep.subr.bf16.mxu0 0
    %594 = vmatpush1.bf16.msra.mxu0 0
    %595 = vmatprep.subr.bf16.mxu0 0
    %596 = vmatpush1.bf16.msra.mxu0 0
    %597 = vmatprep.subr.bf16.mxu0 0
    %598 = vmatpush1.bf16.msra.mxu0 0
    %599 = vmatprep.subr.bf16.mxu0 0
    %600 = vmatpush1.bf16.msra.mxu0 0
    %601 = vmatprep.subr.bf16.mxu0 0
    %602 = vmatpush1.bf16.msra.mxu0 0
    %603 = vmatprep.subr.bf16.mxu0 0
    %604 = vmatpush1.bf16.msra.mxu0 0
    %605 = vmatprep.subr.bf16.mxu0 0
    %606 = vmatpush1.bf16.msra.mxu0 0
    %607 = vmatprep.subr.bf16.mxu0 0
    %608 = vmatpush1.bf16.msra.mxu0 0
    %609 = vmatprep.subr.bf16.mxu0 0
    %610 = vmatpush1.bf16.msra.mxu0 0
    %611 = vmatprep.mubr.bf16.mxu0 0
    %612 = vmatmul.mubr.bf16.gmra.mrb[0].mxu0 %v577
    %v613 = vpop.f32.mrb[0].mxu0
    %v614 = vadd.f32 0.0, %v613
    %v615 = vpop.f32.mrb[0].mxu0
    %v616 = vpop.f32.mrb[0].mxu0
    %v617 = vpop.f32.mrb[0].mxu0
    %618 = vdwg.mxu0
    %v621 = vunpack.c.l.b16 %v570
    %v622 = vunpack.c.l.b16 %v571
    %v623 = vrot.slane %v622, 7
    %v624 = vsel %vm101, %v623, %v621
    %v625 = vpack.c.b16 %v624, %v624
    %v627 = vsel %vm110, %v625, 0
    %629 = vmatprep.subr.bf16.mxu0 0
    %630 = vmatpush1.bf16.msra.mxu0 %v108
    %631 = vmatprep.subr.bf16.mxu0 0
    %632 = vmatpush1.bf16.msra.mxu0 0
    %633 = vmatprep.subr.bf16.mxu0 0
    %634 = vmatpush1.bf16.msra.mxu0 0
    %635 = vmatprep.subr.bf16.mxu0 0
    %636 = vmatpush1.bf16.msra.mxu0 0
    %637 = vmatprep.subr.bf16.mxu0 0
    %638 = vmatpush1.bf16.msra.mxu0 0
    %639 = vmatprep.subr.bf16.mxu0 0
    %640 = vmatpush1.bf16.msra.mxu0 0
    %641 = vmatprep.subr.bf16.mxu0 0
    %642 = vmatpush1.bf16.msra.mxu0 0
    %643 = vmatprep.subr.bf16.mxu0 0
    %644 = vmatpush1.bf16.msra.mxu0 0
    %645 = vmatprep.subr.bf16.mxu0 0
    %646 = vmatpush1.bf16.msra.mxu0 0
    %647 = vmatprep.subr.bf16.mxu0 0
    %648 = vmatpush1.bf16.msra.mxu0 0
    %649 = vmatprep.subr.bf16.mxu0 0
    %650 = vmatpush1.bf16.msra.mxu0 0
    %651 = vmatprep.subr.bf16.mxu0 0
    %652 = vmatpush1.bf16.msra.mxu0 0
    %653 = vmatprep.subr.bf16.mxu0 0
    %654 = vmatpush1.bf16.msra.mxu0 0
    %655 = vmatprep.subr.bf16.mxu0 0
    %656 = vmatpush1.bf16.msra.mxu0 0
    %657 = vmatprep.subr.bf16.mxu0 0
    %658 = vmatpush1.bf16.msra.mxu0 0
    %659 = vmatprep.subr.bf16.mxu0 0
    %660 = vmatpush1.bf16.msra.mxu0 0
    %661 = vmatprep.mubr.bf16.mxu0 0
    %662 = vmatmul.mubr.bf16.gmra.mrb[0].mxu0 %v627
    %v663 = vpop.f32.mrb[0].mxu0
    %v664 = vadd.f32 %v614, %v663
    %v665 = vpop.f32.mrb[0].mxu0
    %v666 = vpop.f32.mrb[0].mxu0
    %v667 = vpop.f32.mrb[0].mxu0
    %668 = vdwg.mxu0
    %v669 = vxor.u32 %v664, 2147483648
    %v670 = vmul.f32 %v669, 1.442695
    %v671 = vpow.pop %v670
    %v672 = vadd.f32 %v671, 1.0
    %v673 = vrcp.pop %v672
    %v674 = vmul.f32 1.0, %v673
    %v675 = vxor.u32 %v674, 2147483648
    %v676 = vmul.f32 %v675, 1.442695
    %v677 = vpow.pop %v676
    %v678 = vadd.f32 %v677, 1.0
    %v679 = vrcp.pop %v678
    %v680 = vmul.f32 1.0, %v679
    %v681 = vtanh.pop %v664
    %v682 = vmul.f32 %v680, %v522
    %684 = vrot.lane.b32.xlu0 %v681, 32
    %v685 = vpop.permute.xlu0 %684
    %v687 = vmul.f32 %v680, %v685
    %689 = vrot.lane.b32.xlu0 %v687, 32
    %v690 = vpop.permute.xlu0 %689
    %v692 = vadd.f32 %v682, %v690
    %v693 = vtanh.pop %v692
    %695 = vrot.lane.b32.xlu0 %v693, 32
    %v696 = vpop.permute.xlu0 %695
    %v698 = vmul.f32 %v680, %v696
    %v701 = vunpack.c.l.s4 1966171168
    %v702 = vunpack.c.0.s8 %v701
    %v703 = vlaneseq
    %v704 = vshrl.u32 %v703, 7
    %v705 = vsub.s32 %v702, %v704
    %v706 = vrot.slane %v698, %v705
    %v707 = vcombine.high %v706, %v706
    %v709 = vunpack.c.l.s4 1966171168
    %v710 = vunpack.c.0.s8 %v709
    %v711 = vlaneseq
    %v712 = vshrl.u32 %v711, 7
    %v713 = vsub.s32 %v710, %v712
    %v714 = vrot.slane %v706, %v713
    %v716 = vunpack.c.l.s4 1966171168
    %v717 = vunpack.c.0.s8 %v716
    %v718 = vlaneseq
    %v719 = vshrl.u32 %v718, 7
    %v720 = vsub.s32 %v717, %v719
    %v721 = vrot.slane %v707, %v720
    %v722 = vlaneseq
    %v723 = vshrl.u32 %v722, 7
    %v724 = vsub.s32 0, %v723
    %v725 = vrot.slane %v714, %v724
    %v726 = vlaneseq
    %v727 = vshrl.u32 %v726, 7
    %v728 = vsub.s32 0, %v727
    %v729 = vrot.slane %v721, %v728
    %730 = vrot.lane.b32.xlu0 %v725, 64
    %v731 = vpop.permute.xlu0 %730
    %732 = vrot.lane.b32.xlu0 %v729, 64
    %v733 = vpop.permute.xlu0 %732
    %736 = vst.msk [vmem:[#allocation2 + $0x3] sm:$0x1] %vm225, %v731
    %737 = vst.msk [vmem:[#allocation2 + $0xb] sm:$0x1] %vm225, %v733
    %v738 = vld [vmem:[%s0 + $0x4] sm:$0x1]
    %v739 = vld [vmem:[%s0 + $0xc] sm:$0x1]
    %v740 = vpack.c.bf16 %v738, %v738
    %v741 = vpack.c.bf16 %v739, %v739
    %v742 = vpack.c.bf16 %v698, %v698
    %744 = vrot.lane.b32.xlu0 %v742, 64
    %v745 = vpop.permute.xlu0 %744
    %v747 = vsel %vm52, %v745, 0
    %749 = vmatprep.subr.bf16.mxu0 0
    %750 = vmatpush1.bf16.msra.mxu0 %v48
    %751 = vmatprep.subr.bf16.mxu0 0
    %752 = vmatpush1.bf16.msra.mxu0 %v49
    %753 = vmatprep.subr.bf16.mxu0 0
    %754 = vmatpush1.bf16.msra.mxu0 0
    %755 = vmatprep.subr.bf16.mxu0 0
    %756 = vmatpush1.bf16.msra.mxu0 0
    %757 = vmatprep.subr.bf16.mxu0 0
    %758 = vmatpush1.bf16.msra.mxu0 0
    %759 = vmatprep.subr.bf16.mxu0 0
    %760 = vmatpush1.bf16.msra.mxu0 0
    %761 = vmatprep.subr.bf16.mxu0 0
    %762 = vmatpush1.bf16.msra.mxu0 0
    %763 = vmatprep.subr.bf16.mxu0 0
    %764 = vmatpush1.bf16.msra.mxu0 0
    %765 = vmatprep.subr.bf16.mxu0 0
    %766 = vmatpush1.bf16.msra.mxu0 0
    %767 = vmatprep.subr.bf16.mxu0 0
    %768 = vmatpush1.bf16.msra.mxu0 0
    %769 = vmatprep.subr.bf16.mxu0 0
    %770 = vmatpush1.bf16.msra.mxu0 0
    %771 = vmatprep.subr.bf16.mxu0 0
    %772 = vmatpush1.bf16.msra.mxu0 0
    %773 = vmatprep.subr.bf16.mxu0 0
    %774 = vmatpush1.bf16.msra.mxu0 0
    %775 = vmatprep.subr.bf16.mxu0 0
    %776 = vmatpush1.bf16.msra.mxu0 0
    %777 = vmatprep.subr.bf16.mxu0 0
    %778 = vmatpush1.bf16.msra.mxu0 0
    %779 = vmatprep.subr.bf16.mxu0 0
    %780 = vmatpush1.bf16.msra.mxu0 0
    %781 = vmatprep.mubr.bf16.mxu0 0
    %782 = vmatmul.mubr.bf16.gmra.mrb[0].mxu0 %v747
    %v783 = vpop.f32.mrb[0].mxu0
    %v784 = vadd.f32 0.0, %v783
    %v785 = vpop.f32.mrb[0].mxu0
    %v786 = vpop.f32.mrb[0].mxu0
    %v787 = vpop.f32.mrb[0].mxu0
    %788 = vdwg.mxu0
    %v791 = vunpack.c.l.b16 %v740
    %v792 = vunpack.c.l.b16 %v741
    %v793 = vrot.slane %v792, 7
    %v794 = vsel %vm101, %v793, %v791
    %v795 = vpack.c.b16 %v794, %v794
    %v797 = vsel %vm110, %v795, 0
    %799 = vmatprep.subr.bf16.mxu0 0
    %800 = vmatpush1.bf16.msra.mxu0 %v108
    %801 = vmatprep.subr.bf16.mxu0 0
    %802 = vmatpush1.bf16.msra.mxu0 0
    %803 = vmatprep.subr.bf16.mxu0 0
    %804 = vmatpush1.bf16.msra.mxu0 0
    %805 = vmatprep.subr.bf16.mxu0 0
    %806 = vmatpush1.bf16.msra.mxu0 0
    %807 = vmatprep.subr.bf16.mxu0 0
    %808 = vmatpush1.bf16.msra.mxu0 0
    %809 = vmatprep.subr.bf16.mxu0 0
    %810 = vmatpush1.bf16.msra.mxu0 0
    %811 = vmatprep.subr.bf16.mxu0 0
    %812 = vmatpush1.bf16.msra.mxu0 0
    %813 = vmatprep.subr.bf16.mxu0 0
    %814 = vmatpush1.bf16.msra.mxu0 0
    %815 = vmatprep.subr.bf16.mxu0 0
    %816 = vmatpush1.bf16.msra.mxu0 0
    %817 = vmatprep.subr.bf16.mxu0 0
    %818 = vmatpush1.bf16.msra.mxu0 0
    %819 = vmatprep.subr.bf16.mxu0 0
    %820 = vmatpush1.bf16.msra.mxu0 0
    %821 = vmatprep.subr.bf16.mxu0 0
    %822 = vmatpush1.bf16.msra.mxu0 0
    %823 = vmatprep.subr.bf16.mxu0 0
    %824 = vmatpush1.bf16.msra.mxu0 0
    %825 = vmatprep.subr.bf16.mxu0 0
    %826 = vmatpush1.bf16.msra.mxu0 0
    %827 = vmatprep.subr.bf16.mxu0 0
    %828 = vmatpush1.bf16.msra.mxu0 0
    %829 = vmatprep.subr.bf16.mxu0 0
    %830 = vmatpush1.bf16.msra.mxu0 0
    %831 = vmatprep.mubr.bf16.mxu0 0
    %832 = vmatmul.mubr.bf16.gmra.mrb[0].mxu0 %v797
    %v833 = vpop.f32.mrb[0].mxu0
    %v834 = vadd.f32 %v784, %v833
    %v835 = vpop.f32.mrb[0].mxu0
    %v836 = vpop.f32.mrb[0].mxu0
    %v837 = vpop.f32.mrb[0].mxu0
    %838 = vdwg.mxu0
    %v839 = vxor.u32 %v834, 2147483648
    %v840 = vmul.f32 %v839, 1.442695
    %v841 = vpow.pop %v840
    %v842 = vadd.f32 %v841, 1.0
    %v843 = vrcp.pop %v842
    %v844 = vmul.f32 1.0, %v843
    %v845 = vxor.u32 %v844, 2147483648
    %v846 = vmul.f32 %v845, 1.442695
    %v847 = vpow.pop %v846
    %v848 = vadd.f32 %v847, 1.0
    %v849 = vrcp.pop %v848
    %v850 = vmul.f32 1.0, %v849
    %v851 = vtanh.pop %v834
    %v852 = vmul.f32 %v850, %v692
    %854 = vrot.lane.b32.xlu0 %v851, 32
    %v855 = vpop.permute.xlu0 %854
    %v857 = vmul.f32 %v850, %v855
    %859 = vrot.lane.b32.xlu0 %v857, 32
    %v860 = vpop.permute.xlu0 %859
    %v862 = vadd.f32 %v852, %v860
    %v863 = vtanh.pop %v862
    %865 = vrot.lane.b32.xlu0 %v863, 32
    %v866 = vpop.permute.xlu0 %865
    %v868 = vmul.f32 %v850, %v866
    %v871 = vunpack.c.l.s4 1966171168
    %v872 = vunpack.c.0.s8 %v871
    %v873 = vlaneseq
    %v874 = vshrl.u32 %v873, 7
    %v875 = vsub.s32 %v872, %v874
    %v876 = vrot.slane %v868, %v875
    %v877 = vcombine.high %v876, %v876
    %v879 = vunpack.c.l.s4 1966171168
    %v880 = vunpack.c.0.s8 %v879
    %v881 = vlaneseq
    %v882 = vshrl.u32 %v881, 7
    %v883 = vsub.s32 %v880, %v882
    %v884 = vrot.slane %v876, %v883
    %v886 = vunpack.c.l.s4 1966171168
    %v887 = vunpack.c.0.s8 %v886
    %v888 = vlaneseq
    %v889 = vshrl.u32 %v888, 7
    %v890 = vsub.s32 %v887, %v889
    %v891 = vrot.slane %v877, %v890
    %v892 = vlaneseq
    %v893 = vshrl.u32 %v892, 7
    %v894 = vsub.s32 0, %v893
    %v895 = vrot.slane %v884, %v894
    %v896 = vlaneseq
    %v897 = vshrl.u32 %v896, 7
    %v898 = vsub.s32 0, %v897
    %v899 = vrot.slane %v891, %v898
    %900 = vrot.lane.b32.xlu0 %v895, 64
    %v901 = vpop.permute.xlu0 %900
    %902 = vrot.lane.b32.xlu0 %v899, 64
    %v903 = vpop.permute.xlu0 %902
    %906 = vst.msk [vmem:[#allocation2 + $0x4] sm:$0x1] %vm225, %v901
    %907 = vst.msk [vmem:[#allocation2 + $0xc] sm:$0x1] %vm225, %v903
    %v908 = vld [vmem:[%s0 + $0x5] sm:$0x1]
    %v909 = vld [vmem:[%s0 + $0xd] sm:$0x1]
    %v910 = vpack.c.bf16 %v908, %v908
    %v911 = vpack.c.bf16 %v909, %v909
    %v912 = vpack.c.bf16 %v868, %v868
    %914 = vrot.lane.b32.xlu0 %v912, 64
    %v915 = vpop.permute.xlu0 %914
    %v917 = vsel %vm52, %v915, 0
    %919 = vmatprep.subr.bf16.mxu0 0
    %920 = vmatpush1.bf16.msra.mxu0 %v48
    %921 = vmatprep.subr.bf16.mxu0 0
    %922 = vmatpush1.bf16.msra.mxu0 %v49
    %923 = vmatprep.subr.bf16.mxu0 0
    %924 = vmatpush1.bf16.msra.mxu0 0
    %925 = vmatprep.subr.bf16.mxu0 0
    %926 = vmatpush1.bf16.msra.mxu0 0
    %927 = vmatprep.subr.bf16.mxu0 0
    %928 = vmatpush1.bf16.msra.mxu0 0
    %929 = vmatprep.subr.bf16.mxu0 0
    %930 = vmatpush1.bf16.msra.mxu0 0
    %931 = vmatprep.subr.bf16.mxu0 0
    %932 = vmatpush1.bf16.msra.mxu0 0
    %933 = vmatprep.subr.bf16.mxu0 0
    %934 = vmatpush1.bf16.msra.mxu0 0
    %935 = vmatprep.subr.bf16.mxu0 0
    %936 = vmatpush1.bf16.msra.mxu0 0
    %937 = vmatprep.subr.bf16.mxu0 0
    %938 = vmatpush1.bf16.msra.mxu0 0
    %939 = vmatprep.subr.bf16.mxu0 0
    %940 = vmatpush1.bf16.msra.mxu0 0
    %941 = vmatprep.subr.bf16.mxu0 0
    %942 = vmatpush1.bf16.msra.mxu0 0
    %943 = vmatprep.subr.bf16.mxu0 0
    %944 = vmatpush1.bf16.msra.mxu0 0
    %945 = vmatprep.subr.bf16.mxu0 0
    %946 = vmatpush1.bf16.msra.mxu0 0
    %947 = vmatprep.subr.bf16.mxu0 0
    %948 = vmatpush1.bf16.msra.mxu0 0
    %949 = vmatprep.subr.bf16.mxu0 0
    %950 = vmatpush1.bf16.msra.mxu0 0
    %951 = vmatprep.mubr.bf16.mxu0 0
    %952 = vmatmul.mubr.bf16.gmra.mrb[0].mxu0 %v917
    %v953 = vpop.f32.mrb[0].mxu0
    %v954 = vadd.f32 0.0, %v953
    %v955 = vpop.f32.mrb[0].mxu0
    %v956 = vpop.f32.mrb[0].mxu0
    %v957 = vpop.f32.mrb[0].mxu0
    %958 = vdwg.mxu0
    %v961 = vunpack.c.l.b16 %v910
    %v962 = vunpack.c.l.b16 %v911
    %v963 = vrot.slane %v962, 7
    %v964 = vsel %vm101, %v963, %v961
    %v965 = vpack.c.b16 %v964, %v964
    %v967 = vsel %vm110, %v965, 0
    %969 = vmatprep.subr.bf16.mxu0 0
    %970 = vmatpush1.bf16.msra.mxu0 %v108
    %971 = vmatprep.subr.bf16.mxu0 0
    %972 = vmatpush1.bf16.msra.mxu0 0
    %973 = vmatprep.subr.bf16.mxu0 0
    %974 = vmatpush1.bf16.msra.mxu0 0
    %975 = vmatprep.subr.bf16.mxu0 0
    %976 = vmatpush1.bf16.msra.mxu0 0
    %977 = vmatprep.subr.bf16.mxu0 0
    %978 = vmatpush1.bf16.msra.mxu0 0
    %979 = vmatprep.subr.bf16.mxu0 0
    %980 = vmatpush1.bf16.msra.mxu0 0
    %981 = vmatprep.subr.bf16.mxu0 0
    %982 = vmatpush1.bf16.msra.mxu0 0
    %983 = vmatprep.subr.bf16.mxu0 0
    %984 = vmatpush1.bf16.msra.mxu0 0
    %985 = vmatprep.subr.bf16.mxu0 0
    %986 = vmatpush1.bf16.msra.mxu0 0
    %987 = vmatprep.subr.bf16.mxu0 0
    %988 = vmatpush1.bf16.msra.mxu0 0
    %989 = vmatprep.subr.bf16.mxu0 0
    %990 = vmatpush1.bf16.msra.mxu0 0
    %991 = vmatprep.subr.bf16.mxu0 0
    %992 = vmatpush1.bf16.msra.mxu0 0
    %993 = vmatprep.subr.bf16.mxu0 0
    %994 = vmatpush1.bf16.msra.mxu0 0
    %995 = vmatprep.subr.bf16.mxu0 0
    %996 = vmatpush1.bf16.msra.mxu0 0
    %997 = vmatprep.subr.bf16.mxu0 0
    %998 = vmatpush1.bf16.msra.mxu0 0
    %999 = vmatprep.subr.bf16.mxu0 0
    %1000 = vmatpush1.bf16.msra.mxu0 0
    %1001 = vmatprep.mubr.bf16.mxu0 0
    %1002 = vmatmul.mubr.bf16.gmra.mrb[0].mxu0 %v967
    %v1003 = vpop.f32.mrb[0].mxu0
    %v1004 = vadd.f32 %v954, %v1003
    %v1005 = vpop.f32.mrb[0].mxu0
    %v1006 = vpop.f32.mrb[0].mxu0
    %v1007 = vpop.f32.mrb[0].mxu0
    %1008 = vdwg.mxu0
    %v1009 = vxor.u32 %v1004, 2147483648
    %v1010 = vmul.f32 %v1009, 1.442695
    %v1011 = vpow.pop %v1010
    %v1012 = vadd.f32 %v1011, 1.0
    %v1013 = vrcp.pop %v1012
    %v1014 = vmul.f32 1.0, %v1013
    %v1015 = vxor.u32 %v1014, 2147483648
    %v1016 = vmul.f32 %v1015, 1.442695
    %v1017 = vpow.pop %v1016
    %v1018 = vadd.f32 %v1017, 1.0
    %v1019 = vrcp.pop %v1018
    %v1020 = vmul.f32 1.0, %v1019
    %v1021 = vtanh.pop %v1004
    %v1022 = vmul.f32 %v1020, %v862
    %1024 = vrot.lane.b32.xlu0 %v1021, 32
    %v1025 = vpop.permute.xlu0 %1024
    %v1027 = vmul.f32 %v1020, %v1025
    %1029 = vrot.lane.b32.xlu0 %v1027, 32
    %v1030 = vpop.permute.xlu0 %1029
    %v1032 = vadd.f32 %v1022, %v1030
    %v1033 = vtanh.pop %v1032
    %1035 = vrot.lane.b32.xlu0 %v1033, 32
    %v1036 = vpop.permute.xlu0 %1035
    %v1038 = vmul.f32 %v1020, %v1036
    %v1041 = vunpack.c.l.s4 1966171168
    %v1042 = vunpack.c.0.s8 %v1041
    %v1043 = vlaneseq
    %v1044 = vshrl.u32 %v1043, 7
    %v1045 = vsub.s32 %v1042, %v1044
    %v1046 = vrot.slane %v1038, %v1045
    %v1047 = vcombine.high %v1046, %v1046
    %v1049 = vunpack.c.l.s4 1966171168
    %v1050 = vunpack.c.0.s8 %v1049
    %v1051 = vlaneseq
    %v1052 = vshrl.u32 %v1051, 7
    %v1053 = vsub.s32 %v1050, %v1052
    %v1054 = vrot.slane %v1046, %v1053
    %v1056 = vunpack.c.l.s4 1966171168
    %v1057 = vunpack.c.0.s8 %v1056
    %v1058 = vlaneseq
    %v1059 = vshrl.u32 %v1058, 7
    %v1060 = vsub.s32 %v1057, %v1059
    %v1061 = vrot.slane %v1047, %v1060
    %v1062 = vlaneseq
    %v1063 = vshrl.u32 %v1062, 7
    %v1064 = vsub.s32 0, %v1063
    %v1065 = vrot.slane %v1054, %v1064
    %v1066 = vlaneseq
    %v1067 = vshrl.u32 %v1066, 7
    %v1068 = vsub.s32 0, %v1067
    %v1069 = vrot.slane %v1061, %v1068
    %1070 = vrot.lane.b32.xlu0 %v1065, 64
    %v1071 = vpop.permute.xlu0 %1070
    %1072 = vrot.lane.b32.xlu0 %v1069, 64
    %v1073 = vpop.permute.xlu0 %1072
    %1076 = vst.msk [vmem:[#allocation2 + $0x5] sm:$0x1] %vm225, %v1071
    %1077 = vst.msk [vmem:[#allocation2 + $0xd] sm:$0x1] %vm225, %v1073
    %v1078 = vld [vmem:[%s0 + $0x6] sm:$0x1]
    %v1079 = vld [vmem:[%s0 + $0xe] sm:$0x1]
    %v1080 = vpack.c.bf16 %v1078, %v1078
    %v1081 = vpack.c.bf16 %v1079, %v1079
    %v1082 = vpack.c.bf16 %v1038, %v1038
    %1084 = vrot.lane.b32.xlu0 %v1082, 64
    %v1085 = vpop.permute.xlu0 %1084
    %v1087 = vsel %vm52, %v1085, 0
    %1089 = vmatprep.subr.bf16.mxu0 0
    %1090 = vmatpush1.bf16.msra.mxu0 %v48
    %1091 = vmatprep.subr.bf16.mxu0 0
    %1092 = vmatpush1.bf16.msra.mxu0 %v49
    %1093 = vmatprep.subr.bf16.mxu0 0
    %1094 = vmatpush1.bf16.msra.mxu0 0
    %1095 = vmatprep.subr.bf16.mxu0 0
    %1096 = vmatpush1.bf16.msra.mxu0 0
    %1097 = vmatprep.subr.bf16.mxu0 0
    %1098 = vmatpush1.bf16.msra.mxu0 0
    %1099 = vmatprep.subr.bf16.mxu0 0
    %1100 = vmatpush1.bf16.msra.mxu0 0
    %1101 = vmatprep.subr.bf16.mxu0 0
    %1102 = vmatpush1.bf16.msra.mxu0 0
    %1103 = vmatprep.subr.bf16.mxu0 0
    %1104 = vmatpush1.bf16.msra.mxu0 0
    %1105 = vmatprep.subr.bf16.mxu0 0
    %1106 = vmatpush1.bf16.msra.mxu0 0
    %1107 = vmatprep.subr.bf16.mxu0 0
    %1108 = vmatpush1.bf16.msra.mxu0 0
    %1109 = vmatprep.subr.bf16.mxu0 0
    %1110 = vmatpush1.bf16.msra.mxu0 0
    %1111 = vmatprep.subr.bf16.mxu0 0
    %1112 = vmatpush1.bf16.msra.mxu0 0
    %1113 = vmatprep.subr.bf16.mxu0 0
    %1114 = vmatpush1.bf16.msra.mxu0 0
    %1115 = vmatprep.subr.bf16.mxu0 0
    %1116 = vmatpush1.bf16.msra.mxu0 0
    %1117 = vmatprep.subr.bf16.mxu0 0
    %1118 = vmatpush1.bf16.msra.mxu0 0
    %1119 = vmatprep.subr.bf16.mxu0 0
    %1120 = vmatpush1.bf16.msra.mxu0 0
    %1121 = vmatprep.mubr.bf16.mxu0 0
    %1122 = vmatmul.mubr.bf16.gmra.mrb[0].mxu0 %v1087
    %v1123 = vpop.f32.mrb[0].mxu0
    %v1124 = vadd.f32 0.0, %v1123
    %v1125 = vpop.f32.mrb[0].mxu0
    %v1126 = vpop.f32.mrb[0].mxu0
    %v1127 = vpop.f32.mrb[0].mxu0
    %1128 = vdwg.mxu0
    %v1131 = vunpack.c.l.b16 %v1080
    %v1132 = vunpack.c.l.b16 %v1081
    %v1133 = vrot.slane %v1132, 7
    %v1134 = vsel %vm101, %v1133, %v1131
    %v1135 = vpack.c.b16 %v1134, %v1134
    %v1137 = vsel %vm110, %v1135, 0
    %1139 = vmatprep.subr.bf16.mxu0 0
    %1140 = vmatpush1.bf16.msra.mxu0 %v108
    %1141 = vmatprep.subr.bf16.mxu0 0
    %1142 = vmatpush1.bf16.msra.mxu0 0
    %1143 = vmatprep.subr.bf16.mxu0 0
    %1144 = vmatpush1.bf16.msra.mxu0 0
    %1145 = vmatprep.subr.bf16.mxu0 0
    %1146 = vmatpush1.bf16.msra.mxu0 0
    %1147 = vmatprep.subr.bf16.mxu0 0
    %1148 = vmatpush1.bf16.msra.mxu0 0
    %1149 = vmatprep.subr.bf16.mxu0 0
    %1150 = vmatpush1.bf16.msra.mxu0 0
    %1151 = vmatprep.subr.bf16.mxu0 0
    %1152 = vmatpush1.bf16.msra.mxu0 0
    %1153 = vmatprep.subr.bf16.mxu0 0
    %1154 = vmatpush1.bf16.msra.mxu0 0
    %1155 = vmatprep.subr.bf16.mxu0 0
    %1156 = vmatpush1.bf16.msra.mxu0 0
    %1157 = vmatprep.subr.bf16.mxu0 0
    %1158 = vmatpush1.bf16.msra.mxu0 0
    %1159 = vmatprep.subr.bf16.mxu0 0
    %1160 = vmatpush1.bf16.msra.mxu0 0
    %1161 = vmatprep.subr.bf16.mxu0 0
    %1162 = vmatpush1.bf16.msra.mxu0 0
    %1163 = vmatprep.subr.bf16.mxu0 0
    %1164 = vmatpush1.bf16.msra.mxu0 0
    %1165 = vmatprep.subr.bf16.mxu0 0
    %1166 = vmatpush1.bf16.msra.mxu0 0
    %1167 = vmatprep.subr.bf16.mxu0 0
    %1168 = vmatpush1.bf16.msra.mxu0 0
    %1169 = vmatprep.subr.bf16.mxu0 0
    %1170 = vmatpush1.bf16.msra.mxu0 0
    %1171 = vmatprep.mubr.bf16.mxu0 0
    %1172 = vmatmul.mubr.bf16.gmra.mrb[0].mxu0 %v1137
    %v1173 = vpop.f32.mrb[0].mxu0
    %v1174 = vadd.f32 %v1124, %v1173
    %v1175 = vpop.f32.mrb[0].mxu0
    %v1176 = vpop.f32.mrb[0].mxu0
    %v1177 = vpop.f32.mrb[0].mxu0
    %1178 = vdwg.mxu0
    %v1179 = vxor.u32 %v1174, 2147483648
    %v1180 = vmul.f32 %v1179, 1.442695
    %v1181 = vpow.pop %v1180
    %v1182 = vadd.f32 %v1181, 1.0
    %v1183 = vrcp.pop %v1182
    %v1184 = vmul.f32 1.0, %v1183
    %v1185 = vxor.u32 %v1184, 2147483648
    %v1186 = vmul.f32 %v1185, 1.442695
    %v1187 = vpow.pop %v1186
    %v1188 = vadd.f32 %v1187, 1.0
    %v1189 = vrcp.pop %v1188
    %v1190 = vmul.f32 1.0, %v1189
    %v1191 = vtanh.pop %v1174
    %v1192 = vmul.f32 %v1190, %v1032
    %1194 = vrot.lane.b32.xlu0 %v1191, 32
    %v1195 = vpop.permute.xlu0 %1194
    %v1197 = vmul.f32 %v1190, %v1195
    %1199 = vrot.lane.b32.xlu0 %v1197, 32
    %v1200 = vpop.permute.xlu0 %1199
    %v1202 = vadd.f32 %v1192, %v1200
    %v1203 = vtanh.pop %v1202
    %1205 = vrot.lane.b32.xlu0 %v1203, 32
    %v1206 = vpop.permute.xlu0 %1205
    %v1208 = vmul.f32 %v1190, %v1206
    %v1211 = vunpack.c.l.s4 1966171168
    %v1212 = vunpack.c.0.s8 %v1211
    %v1213 = vlaneseq
    %v1214 = vshrl.u32 %v1213, 7
    %v1215 = vsub.s32 %v1212, %v1214
    %v1216 = vrot.slane %v1208, %v1215
    %v1217 = vcombine.high %v1216, %v1216
    %v1219 = vunpack.c.l.s4 1966171168
    %v1220 = vunpack.c.0.s8 %v1219
    %v1221 = vlaneseq
    %v1222 = vshrl.u32 %v1221, 7
    %v1223 = vsub.s32 %v1220, %v1222
    %v1224 = vrot.slane %v1216, %v1223
    %v1226 = vunpack.c.l.s4 1966171168
    %v1227 = vunpack.c.0.s8 %v1226
    %v1228 = vlaneseq
    %v1229 = vshrl.u32 %v1228, 7
    %v1230 = vsub.s32 %v1227, %v1229
    %v1231 = vrot.slane %v1217, %v1230
    %v1232 = vlaneseq
    %v1233 = vshrl.u32 %v1232, 7
    %v1234 = vsub.s32 0, %v1233
    %v1235 = vrot.slane %v1224, %v1234
    %v1236 = vlaneseq
    %v1237 = vshrl.u32 %v1236, 7
    %v1238 = vsub.s32 0, %v1237
    %v1239 = vrot.slane %v1231, %v1238
    %1240 = vrot.lane.b32.xlu0 %v1235, 64
    %v1241 = vpop.permute.xlu0 %1240
    %1242 = vrot.lane.b32.xlu0 %v1239, 64
    %v1243 = vpop.permute.xlu0 %1242
    %1246 = vst.msk [vmem:[#allocation2 + $0x6] sm:$0x1] %vm225, %v1241
    %1247 = vst.msk [vmem:[#allocation2 + $0xe] sm:$0x1] %vm225, %v1243
    %v1248 = vld [vmem:[%s0 + $0x7] sm:$0x1]
    %v1249 = vld [vmem:[%s0 + $0xf] sm:$0x1]
    %v1250 = vpack.c.bf16 %v1248, %v1248
    %v1251 = vpack.c.bf16 %v1249, %v1249
    %v1252 = vpack.c.bf16 %v1208, %v1208
    %1254 = vrot.lane.b32.xlu0 %v1252, 64
    %v1255 = vpop.permute.xlu0 %1254
    %v1257 = vsel %vm52, %v1255, 0
    %1259 = vmatprep.subr.bf16.mxu0 0
    %1260 = vmatpush1.bf16.msra.mxu0 %v48
    %1261 = vmatprep.subr.bf16.mxu0 0
    %1262 = vmatpush1.bf16.msra.mxu0 %v49
    %1263 = vmatprep.subr.bf16.mxu0 0
    %1264 = vmatpush1.bf16.msra.mxu0 0
    %1265 = vmatprep.subr.bf16.mxu0 0
    %1266 = vmatpush1.bf16.msra.mxu0 0
    %1267 = vmatprep.subr.bf16.mxu0 0
    %1268 = vmatpush1.bf16.msra.mxu0 0
    %1269 = vmatprep.subr.bf16.mxu0 0
    %1270 = vmatpush1.bf16.msra.mxu0 0
    %1271 = vmatprep.subr.bf16.mxu0 0
    %1272 = vmatpush1.bf16.msra.mxu0 0
    %1273 = vmatprep.subr.bf16.mxu0 0
    %1274 = vmatpush1.bf16.msra.mxu0 0
    %1275 = vmatprep.subr.bf16.mxu0 0
    %1276 = vmatpush1.bf16.msra.mxu0 0
    %1277 = vmatprep.subr.bf16.mxu0 0
    %1278 = vmatpush1.bf16.msra.mxu0 0
    %1279 = vmatprep.subr.bf16.mxu0 0
    %1280 = vmatpush1.bf16.msra.mxu0 0
    %1281 = vmatprep.subr.bf16.mxu0 0
    %1282 = vmatpush1.bf16.msra.mxu0 0
    %1283 = vmatprep.subr.bf16.mxu0 0
    %1284 = vmatpush1.bf16.msra.mxu0 0
    %1285 = vmatprep.subr.bf16.mxu0 0
    %1286 = vmatpush1.bf16.msra.mxu0 0
    %1287 = vmatprep.subr.bf16.mxu0 0
    %1288 = vmatpush1.bf16.msra.mxu0 0
    %1289 = vmatprep.subr.bf16.mxu0 0
    %1290 = vmatpush1.bf16.msra.mxu0 0
    %1291 = vmatprep.mubr.bf16.mxu0 0
    %1292 = vmatmul.mubr.bf16.gmra.mrb[0].mxu0 %v1257
    %v1293 = vpop.f32.mrb[0].mxu0
    %v1294 = vadd.f32 0.0, %v1293
    %v1295 = vpop.f32.mrb[0].mxu0
    %v1296 = vpop.f32.mrb[0].mxu0
    %v1297 = vpop.f32.mrb[0].mxu0
    %1298 = vdwg.mxu0
    %v1301 = vunpack.c.l.b16 %v1250
    %v1302 = vunpack.c.l.b16 %v1251
    %v1303 = vrot.slane %v1302, 7
    %v1304 = vsel %vm101, %v1303, %v1301
    %v1305 = vpack.c.b16 %v1304, %v1304
    %v1307 = vsel %vm110, %v1305, 0
    %1309 = vmatprep.subr.bf16.mxu0 0
    %1310 = vmatpush1.bf16.msra.mxu0 %v108
    %1311 = vmatprep.subr.bf16.mxu0 0
    %1312 = vmatpush1.bf16.msra.mxu0 0
    %1313 = vmatprep.subr.bf16.mxu0 0
    %1314 = vmatpush1.bf16.msra.mxu0 0
    %1315 = vmatprep.subr.bf16.mxu0 0
    %1316 = vmatpush1.bf16.msra.mxu0 0
    %1317 = vmatprep.subr.bf16.mxu0 0
    %1318 = vmatpush1.bf16.msra.mxu0 0
    %1319 = vmatprep.subr.bf16.mxu0 0
    %1320 = vmatpush1.bf16.msra.mxu0 0
    %1321 = vmatprep.subr.bf16.mxu0 0
    %1322 = vmatpush1.bf16.msra.mxu0 0
    %1323 = vmatprep.subr.bf16.mxu0 0
    %1324 = vmatpush1.bf16.msra.mxu0 0
    %1325 = vmatprep.subr.bf16.mxu0 0
    %1326 = vmatpush1.bf16.msra.mxu0 0
    %1327 = vmatprep.subr.bf16.mxu0 0
    %1328 = vmatpush1.bf16.msra.mxu0 0
    %1329 = vmatprep.subr.bf16.mxu0 0
    %1330 = vmatpush1.bf16.msra.mxu0 0
    %1331 = vmatprep.subr.bf16.mxu0 0
    %1332 = vmatpush1.bf16.msra.mxu0 0
    %1333 = vmatprep.subr.bf16.mxu0 0
    %1334 = vmatpush1.bf16.msra.mxu0 0
    %1335 = vmatprep.subr.bf16.mxu0 0
    %1336 = vmatpush1.bf16.msra.mxu0 0
    %1337 = vmatprep.subr.bf16.mxu0 0
    %1338 = vmatpush1.bf16.msra.mxu0 0
    %1339 = vmatprep.subr.bf16.mxu0 0
    %1340 = vmatpush1.bf16.msra.mxu0 0
    %1341 = vmatprep.mubr.bf16.mxu0 0
    %1342 = vmatmul.mubr.bf16.gmra.mrb[0].mxu0 %v1307
    %v1343 = vpop.f32.mrb[0].mxu0
    %v1344 = vadd.f32 %v1294, %v1343
    %v1345 = vpop.f32.mrb[0].mxu0
    %v1346 = vpop.f32.mrb[0].mxu0
    %v1347 = vpop.f32.mrb[0].mxu0
    %1348 = vdwg.mxu0
    %v1349 = vxor.u32 %v1344, 2147483648
    %v1350 = vmul.f32 %v1349, 1.442695
    %v1351 = vpow.pop %v1350
    %v1352 = vadd.f32 %v1351, 1.0
    %v1353 = vrcp.pop %v1352
    %v1354 = vmul.f32 1.0, %v1353
    %v1355 = vxor.u32 %v1354, 2147483648
    %v1356 = vmul.f32 %v1355, 1.442695
    %v1357 = vpow.pop %v1356
    %v1358 = vadd.f32 %v1357, 1.0
    %v1359 = vrcp.pop %v1358
    %v1360 = vmul.f32 1.0, %v1359
    %v1361 = vtanh.pop %v1344
    %v1362 = vmul.f32 %v1360, %v1202
    %1364 = vrot.lane.b32.xlu0 %v1361, 32
    %v1365 = vpop.permute.xlu0 %1364
    %v1367 = vmul.f32 %v1360, %v1365
    %1369 = vrot.lane.b32.xlu0 %v1367, 32
    %v1370 = vpop.permute.xlu0 %1369
    %v1372 = vadd.f32 %v1362, %v1370
    %v1373 = vtanh.pop %v1372
    %1375 = vrot.lane.b32.xlu0 %v1373, 32
    %v1376 = vpop.permute.xlu0 %1375
    %v1378 = vmul.f32 %v1360, %v1376
    %v1381 = vunpack.c.l.s4 1966171168
    %v1382 = vunpack.c.0.s8 %v1381
    %v1383 = vlaneseq
    %v1384 = vshrl.u32 %v1383, 7
    %v1385 = vsub.s32 %v1382, %v1384
    %v1386 = vrot.slane %v1378, %v1385
    %v1387 = vcombine.high %v1386, %v1386
    %v1389 = vunpack.c.l.s4 1966171168
    %v1390 = vunpack.c.0.s8 %v1389
    %v1391 = vlaneseq
    %v1392 = vshrl.u32 %v1391, 7
    %v1393 = vsub.s32 %v1390, %v1392
    %v1394 = vrot.slane %v1386, %v1393
    %v1396 = vunpack.c.l.s4 1966171168
    %v1397 = vunpack.c.0.s8 %v1396
    %v1398 = vlaneseq
    %v1399 = vshrl.u32 %v1398, 7
    %v1400 = vsub.s32 %v1397, %v1399
    %v1401 = vrot.slane %v1387, %v1400
    %v1402 = vlaneseq
    %v1403 = vshrl.u32 %v1402, 7
    %v1404 = vsub.s32 0, %v1403
    %v1405 = vrot.slane %v1394, %v1404
    %v1406 = vlaneseq
    %v1407 = vshrl.u32 %v1406, 7
    %v1408 = vsub.s32 0, %v1407
    %v1409 = vrot.slane %v1401, %v1408
    %1410 = vrot.lane.b32.xlu0 %v1405, 64
    %v1411 = vpop.permute.xlu0 %1410
    %1412 = vrot.lane.b32.xlu0 %v1409, 64
    %v1413 = vpop.permute.xlu0 %1412
    %1416 = vst.msk [vmem:[#allocation2 + $0x7] sm:$0x1] %vm225, %v1411
    %1417 = vst.msk [vmem:[#allocation2 + $0xf] sm:$0x1] %vm225, %v1413
    %1418 = vrot.lane.b32.xlu0 %v1378, 64
    %v1419 = vpop.permute.xlu0 %1418
    %vm1421 = vcmask 254976
    %1422 = vst.msk [vmem:[#allocation4] sm:$0x3] %vm1421, %v1419
    %1424 = vrot.lane.b32.xlu0 %v1372, 96
    %v1425 = vpop.permute.xlu0 %1424
    %1427 = vst.msk [vmem:[#allocation6] sm:$0x3] %vm1421, %v1425
    // Predicated region
    $region18: #{lstm_cell_forward.1} parent=1 // pred_check
      _
    $region19: #{lstm_cell_forward.1} parent=1 // pred_check_branch
      %1429 = sbr.rel (0) target = $region21
    $region20: #{lstm_cell_forward.1} parent=1 // pred_region
      %s1431 = ssub.s32 256, 256
      %1432 = vsyncadd [#allocation3], %s1431
      %s1433 = sshll.u32 [#allocation2], 4
      %s1434 = int_to_ptr.vmem [resolvable:$true] %s1433
      %1439 = dma.vmem_to_hbm [thread:$0]  %s1434, 256, %s3, [#allocation3], 128, 128, 8
    $region21: #{lstm_cell_forward.1} parent=1 // pred_fallthru
      _
    // Predicated region
    $region22: #{lstm_cell_forward.1} parent=1 // pred_check
      _
    $region23: #{lstm_cell_forward.1} parent=1 // pred_check_branch
      %1441 = sbr.rel (0) target = $region25
    $region24: #{lstm_cell_forward.1} parent=1 // pred_region
      %s1443 = ssub.s32 32, 32
      %1444 = vsyncadd [#allocation5], %s1443
      %s1446 = sshll.u32 [#allocation4], 4
      %s1447 = int_to_ptr.vmem [resolvable:$true] %s1446
      %1449 = dma.vmem_to_hbm [thread:$0]  %s1447, 32, %s4, [#allocation5]
    $region25: #{lstm_cell_forward.1} parent=1 // pred_fallthru
      _
    // Predicated region
    $region26: #{lstm_cell_forward.1} parent=1 // pred_check
      _
    $region27: #{lstm_cell_forward.1} parent=1 // pred_check_branch
      %1451 = sbr.rel (0) target = $region29
    $region28: #{lstm_cell_forward.1} parent=1 // pred_region
      %s1453 = ssub.s32 32, 32
      %1454 = vsyncadd [#allocation5], %s1453
      %s1456 = sshll.u32 [#allocation6], 4
      %s1457 = int_to_ptr.vmem [resolvable:$true] %s1456
      %1459 = dma.vmem_to_hbm [thread:$0]  %s1457, 32, %s5, [#allocation5]
    $region29: #{lstm_cell_forward.1} parent=1 // pred_fallthru
      _
    // Predicated region
    $region30: #{lstm_cell_forward.1} parent=1 // pred_check
      _
    $region31: #{lstm_cell_forward.1} parent=1 // pred_check_branch
      %1461 = sbr.rel (0) target = $region33
    $region32: #{lstm_cell_forward.1} parent=1 // pred_region
      %1462 = dma.done [#allocation3], 256
    $region33: #{lstm_cell_forward.1} parent=1 // pred_fallthru
      _
    // Predicated region
    $region34: #{lstm_cell_forward.1} parent=1 // pred_check
      _
    $region35: #{lstm_cell_forward.1} parent=1 // pred_check_branch
      %1464 = sbr.rel (0) target = $region37
    $region36: #{lstm_cell_forward.1} parent=1 // pred_region
      %1465 = dma.done [#allocation5], 32
    $region37: #{lstm_cell_forward.1} parent=1 // pred_fallthru
      _
    // Predicated region
    $region38: #{lstm_cell_forward.1} parent=1 // pred_check
      _
    $region39: #{lstm_cell_forward.1} parent=1 // pred_check_branch
      %1467 = sbr.rel (0) target = $region41
    $region40: #{lstm_cell_forward.1} parent=1 // pred_region
      %1468 = dma.done [#allocation5], 32
    $region41: #{lstm_cell_forward.1} parent=1 // pred_fallthru
      _
    %1469 = vsyncpa [#allocation3], 1
    %1470 = vsyncpa [#allocation5], 1

</llo_original>
